<compile_context>
chip_gen: v7x
topology: tpu7x:2x2x1
jax: 0.10.0
libtpu: 0.0.40
codegen_flags: <defaults>
</compile_context>

<pallas_src>
import functools

import jax
import jax.numpy as jnp
from jax.experimental import pallas as pl
from jax.experimental.pallas import tpu as pltpu

NEG_SLOPE = 0.01   # torch.nn.LeakyReLU default
LANE = 128
SUBLANE = 8


def _leaky(x):
    return jnp.where(x > 0, x, NEG_SLOPE * x)


def _round_up(v, m):
    return ((v + m - 1) // m) * m


def gnn_kernel(x_ref, src_ref, tgt_ref,
               w0_ref, b0_ref, w1_ref, b1_ref,
               wm1_ref, bm1_ref, wm2_ref, bm2_ref,
               wo1_ref, bo1_ref, wo2_ref, bo2_ref,
               out_ref, *, num_layers):
    f32 = jnp.float32
    bf16 = jnp.bfloat16
    npad = x_ref.shape[0]      # padded node count
    hp = out_ref.shape[1]      # padded hidden (lane-dense, 128-multiple)
    ep = src_ref.shape[1]      # padded edge count

    # --- node-embedding MLP ---
    # Linear(1, H): VPU broadcast outer product (avoids a K=1 MXU matmul).
    h = _leaky(x_ref[...] * w0_ref[...] + b0_ref[...])                      # [Np, Hp]
    h = _leaky(jnp.dot(h, w1_ref[...], preferred_element_type=f32) + b1_ref[...])
    h_orig = h

    # --- graph masks, built once on the VPU from lane-dense edge ids ---
    # Padded edges carry index -1 -> never match -> contribute nothing.
    # smask[n,e] = (tgt[e]==n)  is the scatter one-hot; gmask = [smask ; src_hit]
    # is the combined gather mask (rows 0..Np-1 select ha[tgt], rows Np..2Np-1
    # select hb[src]) -> one mask array instead of three, bf16 (exact 0/1).
    node_rows = jax.lax.broadcasted_iota(jnp.int32, (npad, ep), 0)           # sublane = node
    smask = (node_rows == tgt_ref[...]).astype(bf16)                         # [Np, Ep]
    src_hit = (node_rows == src_ref[...]).astype(bf16)                       # [Np, Ep]
    gmask = jnp.concatenate([smask, src_hit], axis=0)                        # [2Np, Ep]

    # Contract mask dim 0 (node slot) with stacked-activation dim 0.
    gather_dims = (((0,), (0,)), ((), ()))

    for l in range(num_layers):
        # Fused 256-wide node projection: (Gt@h)@W1a == Gt@(h@W1a), run at node
        # granularity with [W1a|W1b] packed into one [Hp, 2Hp] weight.
        hab = jnp.dot(h, wm1_ref[l], preferred_element_type=f32)             # [Np, 2Hp]
        stacked = jnp.concatenate([hab[:, :hp], hab[:, hp:]], axis=0)        # [2Np, Hp] = [ha ; hb]
        # Single gather matmul (bf16 operands, f32 accumulate):
        #   m[e] = ha[tgt[e]] + hb[src[e]]
        m = jax.lax.dot_general(gmask, stacked.astype(bf16),
                                dimension_numbers=gather_dims,
                                preferred_element_type=f32) + bm1_ref[l]     # [Ep, Hp]
        m = jnp.maximum(m, 0.0)                                              # ReLU
        m = jnp.dot(m, wm2_ref[l], preferred_element_type=f32) + bm2_ref[l]  # f32 HxH
        # Scatter-add to target nodes: plain bf16 one-hot matmul.
        h_new = jnp.dot(smask, m.astype(bf16), preferred_element_type=f32)   # [Np, Hp]
        h = _leaky(h_new)
        if l == 0:
            h = h + h_orig
        # TODO(synk): training-mode dropout (p=0.1) intentionally omitted (eval).

    # --- output MLP (lane-dense Hp store, unmasked vst) ---
    out = _leaky(jnp.dot(h, wo1_ref[...], preferred_element_type=f32) + bo1_ref[...])
    out_ref[...] = jnp.dot(out, wo2_ref[...], preferred_element_type=f32) + bo2_ref[...]


def _pad2(a, r, c):
    return jnp.pad(a, ((0, r - a.shape[0]), (0, c - a.shape[1])))


def _pad3(a, r, c):
    return jnp.pad(a, ((0, 0), (0, r - a.shape[1]), (0, c - a.shape[2])))


def clique_potential_gnn(x, edge_index, params, *, num_nodes, hidden_dim,
                         num_layers=3, debug_validate=False):
    """x: [N, 1] float32, edge_index: [2, E] int32 (values in [0, N))."""
    n = num_nodes
    e = edge_index.shape[1]
    if debug_validate:
        # Debug-only host-syncing check (breaks jit); out-of-range indices
        # silently become dropped edges otherwise.
        assert int(jnp.min(edge_index)) >= 0 and int(jnp.max(edge_index)) < n, \
            "edge_index values must lie in [0, num_nodes)"

    hp = max(LANE, _round_up(hidden_dim, LANE))   # lane-dense hidden
    npad = _round_up(n, SUBLANE)
    ep = _round_up(e, SUBLANE)

    # --- tiny lane-dense graph-structure inputs ---
    x_p = jnp.pad(x.astype(jnp.float32), ((0, npad - n), (0, 0)))            # [Np, 1]
    src_row = jnp.pad(edge_index[0].astype(jnp.int32), (0, ep - e),
                      constant_values=-1).reshape(1, ep)                     # [1, Ep]
    tgt_row = jnp.pad(edge_index[1].astype(jnp.int32), (0, ep - e),
                      constant_values=-1).reshape(1, ep)                     # [1, Ep]

    # --- zero-pad all weights / biases to Hp once (padded channels stay 0) ---
    w0 = _pad2(params["w0"], 1, hp)
    b0 = _pad2(params["b0"], 1, hp)
    w1 = _pad2(params["w1"], hp, hp)
    b1 = _pad2(params["b1"], 1, hp)
    # Pack the EdgeConv first linear [W1a | W1b] -> [L, Hp, 2*Hp] (256-wide MXU output).
    wm1 = jnp.concatenate([_pad3(params["wm1a"], hp, hp),
                           _pad3(params["wm1b"], hp, hp)], axis=-1)
    bm1 = _pad3(params["bm1"], 1, hp)
    wm2 = _pad3(params["wm2"], hp, hp)
    bm2 = _pad3(params["bm2"], 1, hp)
    wo1 = _pad2(params["wo1"], hp, hp)
    bo1 = _pad2(params["bo1"], 1, hp)
    wo2 = _pad2(params["wo2"], hp, hp)
    bo2 = _pad2(params["bo2"], 1, hp)

    inputs = (x_p, src_row, tgt_row,
              w0, b0, w1, b1,
              wm1, bm1, wm2, bm2,
              wo1, bo1, wo2, bo2)

    # Advisory cost estimate so XLA can schedule around the custom call.
    per_layer = (2 * npad * hp * (2 * hp)        # h @ [W1a|W1b]
                 + 2 * ep * (2 * npad) * hp      # combined gather matmul
                 + 2 * ep * hp * hp              # m @ W2
                 + 2 * npad * ep * hp)           # scatter matmul
    flops = 2 * npad * hp * hp + num_layers * per_layer + 2 * (2 * npad * hp * hp)
    in_bytes = sum(int(a.size) * a.dtype.itemsize for a in inputs)
    bytes_acc = in_bytes + npad * hp * 4
    ce = pl.CostEstimate(flops=int(flops), transcendentals=0,
                         bytes_accessed=int(bytes_acc))

    # Explicit scoped-VMEM limit (v5e default is only 16 MiB): size it from the
    # actual working set, clamp to v7x's 64 MiB physical VMEM.
    mask_bytes = 3 * npad * ep * 2                       # gmask + smask, bf16
    act_bytes = (8 * npad * hp + 4 * ep * hp) * 4        # activations / intermediates
    vmem_est = 2 * in_bytes + mask_bytes + act_bytes + 2 * npad * hp * 4 + (4 << 20)
    vmem_limit = int(min(max(vmem_est, 32 << 20), 64 << 20))

    # Whole-array single-block call: at these sizes the working set (weights +
    # one [2Np,Ep] bf16 mask + node/edge activations) fits VMEM trivially.
    # TODO(synk): for large graphs, add an edge-tile / target-node-tile grid
    # (rebuild mask slices per tile on the VPU, accumulator scratch,
    # "parallel" node-tile axis to engage v7x's 2nd TensorCore), sizing tiles
    # for v7x's 64 MiB. Asymptotically, replace the dense one-hot matmuls with
    # scalar-prefetch row gather + CSR-sorted segment accumulation.
    vmem_spec = pl.BlockSpec(memory_space=pltpu.MemorySpace.VMEM)
    out_p = pl.pallas_call(
        functools.partial(gnn_kernel, num_layers=num_layers),
        out_shape=jax.ShapeDtypeStruct((npad, hp), jnp.float32),
        in_specs=[vmem_spec] * len(inputs),
        out_specs=vmem_spec,
        compiler_params=pltpu.CompilerParams(vmem_limit_bytes=vmem_limit),
        cost_estimate=ce,
    )(*inputs)
    return out_p[:n, :hidden_dim]


def init_params(key, hidden_dim, num_layers):
    h = hidden_dim
    ks = jax.random.split(key, 16)
    scale = 0.1
    return {
        "w0":   scale * jax.random.normal(ks[0], (1, h), jnp.float32),
        "b0":   scale * jax.random.normal(ks[1], (1, h), jnp.float32),
        "w1":   scale * jax.random.normal(ks[2], (h, h), jnp.float32),
        "b1":   scale * jax.random.normal(ks[3], (1, h), jnp.float32),
        # EdgeConv MLP per layer, first linear split into (x_i | x_j) halves.
        "wm1a": scale * jax.random.normal(ks[4], (num_layers, h, h), jnp.float32),
        "wm1b": scale * jax.random.normal(ks[5], (num_layers, h, h), jnp.float32),
        "bm1":  scale * jax.random.normal(ks[6], (num_layers, 1, h), jnp.float32),
        "wm2":  scale * jax.random.normal(ks[7], (num_layers, h, h), jnp.float32),
        "bm2":  scale * jax.random.normal(ks[8], (num_layers, 1, h), jnp.float32),
        "wo1":  scale * jax.random.normal(ks[9], (h, h), jnp.float32),
        "bo1":  scale * jax.random.normal(ks[10], (1, h), jnp.float32),
        "wo2":  scale * jax.random.normal(ks[11], (h, h), jnp.float32),
        "bo2":  scale * jax.random.normal(ks[12], (1, h), jnp.float32),
    }


def reference_forward(x, edge_index, params, num_layers):
    """Pure-JAX f32 reference using explicit gather / segment_sum (unpadded)."""
    n = x.shape[0]
    h = _leaky(x @ params["w0"] + params["b0"])
    h = _leaky(h @ params["w1"] + params["b1"])
    h_orig = h
    src, tgt = edge_index[0], edge_index[1]
    for l in range(num_layers):
        x_i, x_j = h[tgt], h[src]
        m = x_i @ params["wm1a"][l] + x_j @ params["wm1b"][l] + params["bm1"][l]
        m = jnp.maximum(m, 0.0)
        m = m @ params["wm2"][l] + params["bm2"][l]
        h_new = jax.ops.segment_sum(m, tgt, num_segments=n)
        h = _leaky(h_new)
        if l == 0:
            h = h + h_orig
    out = _leaky(h @ params["wo1"] + params["bo1"])
    return out @ params["wo2"] + params["bo2"]


if __name__ == "__main__":
    NUM_NODES = 16
    HIDDEN = 32
    NUM_LAYERS = 3

    key = jax.random.PRNGKey(0)
    kx, kp = jax.random.split(key)

    # Node features: shape [num_nodes, 1]
    x = jax.random.normal(kx, (NUM_NODES, 1), jnp.float32)

    # Simple bidirectional ring graph -> edge_index [2, 2*N]
    idx = jnp.arange(NUM_NODES, dtype=jnp.int32)
    nxt = (idx + 1) % NUM_NODES
    edge_index = jnp.stack([jnp.concatenate([idx, nxt]),
                            jnp.concatenate([nxt, idx])], axis=0)  # [2, 32]

    params = init_params(kp, HIDDEN, NUM_LAYERS)

    # Wrapper is jit-compatible now (no host-syncing asserts).
    fwd = jax.jit(clique_potential_gnn,
                  static_argnames=("num_nodes", "hidden_dim", "num_layers"))
    out = fwd(x, edge_index, params, num_nodes=NUM_NODES,
              hidden_dim=HIDDEN, num_layers=NUM_LAYERS)
    out = jax.block_until_ready(out)

    ref = reference_forward(x, edge_index, params, NUM_LAYERS)
    assert out.shape == (NUM_NODES, HIDDEN)
    # Gather/scatter one-hot matmuls run in bf16 (masks are exact; activations
    # bf16-rounded once per one-hot matmul) -> relaxed tolerance vs f32 reference.
    assert jnp.allclose(out, ref, atol=2e-2, rtol=2e-2), "mismatch vs reference"

    print("KERNEL_OK")
</pallas_src>

<mosaic_0001>
module attributes {stable_mosaic.version = 11 : i64} {
  func.func @gnn_kernel(%arg0: memref<16x1xf32, #tpu.memory_space<vmem>>, %arg1: memref<1x32xi32, #tpu.memory_space<vmem>>, %arg2: memref<1x32xi32, #tpu.memory_space<vmem>>, %arg3: memref<1x128xf32, #tpu.memory_space<vmem>>, %arg4: memref<1x128xf32, #tpu.memory_space<vmem>>, %arg5: memref<128x128xf32, #tpu.memory_space<vmem>>, %arg6: memref<1x128xf32, #tpu.memory_space<vmem>>, %arg7: memref<3x128x256xf32, #tpu.memory_space<vmem>>, %arg8: memref<3x1x128xf32, #tpu.memory_space<vmem>>, %arg9: memref<3x128x128xf32, #tpu.memory_space<vmem>>, %arg10: memref<3x1x128xf32, #tpu.memory_space<vmem>>, %arg11: memref<128x128xf32, #tpu.memory_space<vmem>>, %arg12: memref<1x128xf32, #tpu.memory_space<vmem>>, %arg13: memref<128x128xf32, #tpu.memory_space<vmem>>, %arg14: memref<1x128xf32, #tpu.memory_space<vmem>>, %arg15: memref<16x128xf32, #tpu.memory_space<vmem>>) attributes {dimension_semantics = [], scalar_prefetch = 0 : i64, scratch_operands = 0 : i64, tpu.core_type = #tpu.core_type<tc>} {
    %c0 = arith.constant 0 : index
    %c0_0 = arith.constant 0 : index
    %0 = vector.load %arg0[%c0, %c0_0] : memref<16x1xf32, #tpu.memory_space<vmem>>, vector<16x1xf32>
    %c0_1 = arith.constant 0 : index
    %c0_2 = arith.constant 0 : index
    %1 = vector.load %arg3[%c0_1, %c0_2] : memref<1x128xf32, #tpu.memory_space<vmem>>, vector<1x128xf32>
    %2 = vector.broadcast %0 : vector<16x1xf32> to vector<16x128xf32>
    %3 = vector.broadcast %1 : vector<1x128xf32> to vector<16x128xf32>
    %4 = arith.mulf %2, %3 : vector<16x128xf32>
    %c0_3 = arith.constant 0 : index
    %c0_4 = arith.constant 0 : index
    %5 = vector.load %arg4[%c0_3, %c0_4] : memref<1x128xf32, #tpu.memory_space<vmem>>, vector<1x128xf32>
    %6 = vector.broadcast %5 : vector<1x128xf32> to vector<16x128xf32>
    %7 = arith.addf %4, %6 : vector<16x128xf32>
    %cst = arith.constant 0.000000e+00 : f32
    %8 = vector.broadcast %cst : f32 to vector<16x128xf32>
    %9 = arith.cmpf ogt, %7, %8 : vector<16x128xf32>
    %cst_5 = arith.constant 0.00999999977 : f32
    %10 = vector.broadcast %cst_5 : f32 to vector<16x128xf32>
    %11 = arith.mulf %10, %7 : vector<16x128xf32>
    %12 = arith.select %9, %7, %11 : vector<16x128xi1>, vector<16x128xf32>
    %c0_6 = arith.constant 0 : index
    %c0_7 = arith.constant 0 : index
    %13 = vector.load %arg5[%c0_6, %c0_7] : memref<128x128xf32, #tpu.memory_space<vmem>>, vector<128x128xf32>
    %cst_8 = arith.constant dense<0.000000e+00> : vector<16x128xf32>
    %14 = tpu.matmul %12, %13, %cst_8 {dimension_numbers = #tpu.dot_dimension_numbers<[1], [0], [0], [1], [0, 0, 1, 1], [], []>} : vector<16x128xf32>, vector<128x128xf32>, vector<16x128xf32> -> vector<16x128xf32>
    %c0_9 = arith.constant 0 : index
    %c0_10 = arith.constant 0 : index
    %15 = vector.load %arg6[%c0_9, %c0_10] : memref<1x128xf32, #tpu.memory_space<vmem>>, vector<1x128xf32>
    %16 = vector.broadcast %15 : vector<1x128xf32> to vector<16x128xf32>
    %17 = arith.addf %14, %16 : vector<16x128xf32>
    %cst_11 = arith.constant 0.000000e+00 : f32
    %18 = vector.broadcast %cst_11 : f32 to vector<16x128xf32>
    %19 = arith.cmpf ogt, %17, %18 : vector<16x128xf32>
    %cst_12 = arith.constant 0.00999999977 : f32
    %20 = vector.broadcast %cst_12 : f32 to vector<16x128xf32>
    %21 = arith.mulf %20, %17 : vector<16x128xf32>
    %22 = arith.select %19, %17, %21 : vector<16x128xi1>, vector<16x128xf32>
    %23 = tpu.iota {dimensions = array<i32: 0>} : vector<16x32xi32>
    %c0_13 = arith.constant 0 : index
    %c0_14 = arith.constant 0 : index
    %24 = vector.load %arg2[%c0_13, %c0_14] : memref<1x32xi32, #tpu.memory_space<vmem>>, vector<1x32xi32>
    %25 = vector.broadcast %24 : vector<1x32xi32> to vector<16x32xi32>
    %26 = arith.cmpi eq, %23, %25 : vector<16x32xi32>
    %27 = arith.extui %26 : vector<16x32xi1> to vector<16x32xi32>
    %28 = arith.sitofp %27 : vector<16x32xi32> to vector<16x32xf32>
    %29 = arith.truncf %28 : vector<16x32xf32> to vector<16x32xbf16>
    %c0_15 = arith.constant 0 : index
    %c0_16 = arith.constant 0 : index
    %30 = vector.load %arg1[%c0_15, %c0_16] : memref<1x32xi32, #tpu.memory_space<vmem>>, vector<1x32xi32>
    %31 = vector.broadcast %30 : vector<1x32xi32> to vector<16x32xi32>
    %32 = arith.cmpi eq, %23, %31 : vector<16x32xi32>
    %33 = arith.extui %32 : vector<16x32xi1> to vector<16x32xi32>
    %34 = arith.sitofp %33 : vector<16x32xi32> to vector<16x32xf32>
    %35 = arith.truncf %34 : vector<16x32xf32> to vector<16x32xbf16>
    %36 = tpu.concatenate %29, %35 in 0 : vector<16x32xbf16>, vector<16x32xbf16> -> vector<32x32xbf16>
    %c0_17 = arith.constant 0 : index
    %c0_18 = arith.constant 0 : index
    %c0_19 = arith.constant 0 : index
    %37 = vector.load %arg7[%c0_17, %c0_18, %c0_19] : memref<3x128x256xf32, #tpu.memory_space<vmem>>, vector<1x128x256xf32>
    %38 = vector.shape_cast %37 : vector<1x128x256xf32> to vector<128x256xf32>
    %cst_20 = arith.constant dense<0.000000e+00> : vector<16x256xf32>
    %39 = tpu.matmul %22, %38, %cst_20 {dimension_numbers = #tpu.dot_dimension_numbers<[1], [0], [0], [1], [0, 0, 1, 1], [], []>} : vector<16x128xf32>, vector<128x256xf32>, vector<16x256xf32> -> vector<16x256xf32>
    %40 = vector.extract_strided_slice %39 {offsets = [0, 0], sizes = [16, 128], strides = [1, 1]} : vector<16x256xf32> to vector<16x128xf32>
    %41 = vector.extract_strided_slice %39 {offsets = [0, 128], sizes = [16, 128], strides = [1, 1]} : vector<16x256xf32> to vector<16x128xf32>
    %42 = tpu.concatenate %40, %41 in 0 : vector<16x128xf32>, vector<16x128xf32> -> vector<32x128xf32>
    %43 = arith.truncf %42 : vector<32x128xf32> to vector<32x128xbf16>
    %cst_21 = arith.constant dense<0.000000e+00> : vector<32x128xf32>
    %44 = tpu.matmul %36, %43, %cst_21 {dimension_numbers = #tpu.dot_dimension_numbers<[0], [0], [1], [1], [0, 1, 1, 1], [], []>} : vector<32x32xbf16>, vector<32x128xbf16>, vector<32x128xf32> -> vector<32x128xf32>
    %c0_22 = arith.constant 0 : index
    %c0_23 = arith.constant 0 : index
    %c0_24 = arith.constant 0 : index
    %45 = vector.load %arg8[%c0_22, %c0_23, %c0_24] : memref<3x1x128xf32, #tpu.memory_space<vmem>>, vector<1x1x128xf32>
    %46 = vector.shape_cast %45 : vector<1x1x128xf32> to vector<1x128xf32>
    %47 = vector.broadcast %46 : vector<1x128xf32> to vector<32x128xf32>
    %48 = arith.addf %44, %47 : vector<32x128xf32>
    %cst_25 = arith.constant 0.000000e+00 : f32
    %49 = vector.broadcast %cst_25 : f32 to vector<32x128xf32>
    %50 = arith.maximumf %48, %49 : vector<32x128xf32>
    %c0_26 = arith.constant 0 : index
    %c0_27 = arith.constant 0 : index
    %c0_28 = arith.constant 0 : index
    %51 = vector.load %arg9[%c0_26, %c0_27, %c0_28] : memref<3x128x128xf32, #tpu.memory_space<vmem>>, vector<1x128x128xf32>
    %52 = vector.shape_cast %51 : vector<1x128x128xf32> to vector<128x128xf32>
    %cst_29 = arith.constant dense<0.000000e+00> : vector<32x128xf32>
    %53 = tpu.matmul %50, %52, %cst_29 {dimension_numbers = #tpu.dot_dimension_numbers<[1], [0], [0], [1], [0, 0, 1, 1], [], []>} : vector<32x128xf32>, vector<128x128xf32>, vector<32x128xf32> -> vector<32x128xf32>
    %c0_30 = arith.constant 0 : index
    %c0_31 = arith.constant 0 : index
    %c0_32 = arith.constant 0 : index
    %54 = vector.load %arg10[%c0_30, %c0_31, %c0_32] : memref<3x1x128xf32, #tpu.memory_space<vmem>>, vector<1x1x128xf32>
    %55 = vector.shape_cast %54 : vector<1x1x128xf32> to vector<1x128xf32>
    %56 = vector.broadcast %55 : vector<1x128xf32> to vector<32x128xf32>
    %57 = arith.addf %53, %56 : vector<32x128xf32>
    %58 = arith.truncf %57 : vector<32x128xf32> to vector<32x128xbf16>
    %cst_33 = arith.constant dense<0.000000e+00> : vector<16x128xf32>
    %59 = tpu.matmul %29, %58, %cst_33 {dimension_numbers = #tpu.dot_dimension_numbers<[1], [0], [0], [1], [0, 0, 1, 1], [], []>} : vector<16x32xbf16>, vector<32x128xbf16>, vector<16x128xf32> -> vector<16x128xf32>
    %cst_34 = arith.constant 0.000000e+00 : f32
    %60 = vector.broadcast %cst_34 : f32 to vector<16x128xf32>
    %61 = arith.cmpf ogt, %59, %60 : vector<16x128xf32>
    %cst_35 = arith.constant 0.00999999977 : f32
    %62 = vector.broadcast %cst_35 : f32 to vector<16x128xf32>
    %63 = arith.mulf %62, %59 : vector<16x128xf32>
    %64 = arith.select %61, %59, %63 : vector<16x128xi1>, vector<16x128xf32>
    %65 = arith.addf %64, %22 : vector<16x128xf32>
    %c1 = arith.constant 1 : index
    %c0_36 = arith.constant 0 : index
    %c0_37 = arith.constant 0 : index
    %66 = vector.load %arg7[%c1, %c0_36, %c0_37] : memref<3x128x256xf32, #tpu.memory_space<vmem>>, vector<1x128x256xf32>
    %67 = vector.shape_cast %66 : vector<1x128x256xf32> to vector<128x256xf32>
    %cst_38 = arith.constant dense<0.000000e+00> : vector<16x256xf32>
    %68 = tpu.matmul %65, %67, %cst_38 {dimension_numbers = #tpu.dot_dimension_numbers<[1], [0], [0], [1], [0, 0, 1, 1], [], []>} : vector<16x128xf32>, vector<128x256xf32>, vector<16x256xf32> -> vector<16x256xf32>
    %69 = vector.extract_strided_slice %68 {offsets = [0, 0], sizes = [16, 128], strides = [1, 1]} : vector<16x256xf32> to vector<16x128xf32>
    %70 = vector.extract_strided_slice %68 {offsets = [0, 128], sizes = [16, 128], strides = [1, 1]} : vector<16x256xf32> to vector<16x128xf32>
    %71 = tpu.concatenate %69, %70 in 0 : vector<16x128xf32>, vector<16x128xf32> -> vector<32x128xf32>
    %72 = arith.truncf %71 : vector<32x128xf32> to vector<32x128xbf16>
    %cst_39 = arith.constant dense<0.000000e+00> : vector<32x128xf32>
    %73 = tpu.matmul %36, %72, %cst_39 {dimension_numbers = #tpu.dot_dimension_numbers<[0], [0], [1], [1], [0, 1, 1, 1], [], []>} : vector<32x32xbf16>, vector<32x128xbf16>, vector<32x128xf32> -> vector<32x128xf32>
    %c1_40 = arith.constant 1 : index
    %c0_41 = arith.constant 0 : index
    %c0_42 = arith.constant 0 : index
    %74 = vector.load %arg8[%c1_40, %c0_41, %c0_42] : memref<3x1x128xf32, #tpu.memory_space<vmem>>, vector<1x1x128xf32>
    %75 = vector.shape_cast %74 : vector<1x1x128xf32> to vector<1x128xf32>
    %76 = vector.broadcast %75 : vector<1x128xf32> to vector<32x128xf32>
    %77 = arith.addf %73, %76 : vector<32x128xf32>
    %cst_43 = arith.constant 0.000000e+00 : f32
    %78 = vector.broadcast %cst_43 : f32 to vector<32x128xf32>
    %79 = arith.maximumf %77, %78 : vector<32x128xf32>
    %c1_44 = arith.constant 1 : index
    %c0_45 = arith.constant 0 : index
    %c0_46 = arith.constant 0 : index
    %80 = vector.load %arg9[%c1_44, %c0_45, %c0_46] : memref<3x128x128xf32, #tpu.memory_space<vmem>>, vector<1x128x128xf32>
    %81 = vector.shape_cast %80 : vector<1x128x128xf32> to vector<128x128xf32>
    %cst_47 = arith.constant dense<0.000000e+00> : vector<32x128xf32>
    %82 = tpu.matmul %79, %81, %cst_47 {dimension_numbers = #tpu.dot_dimension_numbers<[1], [0], [0], [1], [0, 0, 1, 1], [], []>} : vector<32x128xf32>, vector<128x128xf32>, vector<32x128xf32> -> vector<32x128xf32>
    %c1_48 = arith.constant 1 : index
    %c0_49 = arith.constant 0 : index
    %c0_50 = arith.constant 0 : index
    %83 = vector.load %arg10[%c1_48, %c0_49, %c0_50] : memref<3x1x128xf32, #tpu.memory_space<vmem>>, vector<1x1x128xf32>
    %84 = vector.shape_cast %83 : vector<1x1x128xf32> to vector<1x128xf32>
    %85 = vector.broadcast %84 : vector<1x128xf32> to vector<32x128xf32>
    %86 = arith.addf %82, %85 : vector<32x128xf32>
    %87 = arith.truncf %86 : vector<32x128xf32> to vector<32x128xbf16>
    %cst_51 = arith.constant dense<0.000000e+00> : vector<16x128xf32>
    %88 = tpu.matmul %29, %87, %cst_51 {dimension_numbers = #tpu.dot_dimension_numbers<[1], [0], [0], [1], [0, 0, 1, 1], [], []>} : vector<16x32xbf16>, vector<32x128xbf16>, vector<16x128xf32> -> vector<16x128xf32>
    %cst_52 = arith.constant 0.000000e+00 : f32
    %89 = vector.broadcast %cst_52 : f32 to vector<16x128xf32>
    %90 = arith.cmpf ogt, %88, %89 : vector<16x128xf32>
    %cst_53 = arith.constant 0.00999999977 : f32
    %91 = vector.broadcast %cst_53 : f32 to vector<16x128xf32>
    %92 = arith.mulf %91, %88 : vector<16x128xf32>
    %93 = arith.select %90, %88, %92 : vector<16x128xi1>, vector<16x128xf32>
    %c2 = arith.constant 2 : index
    %c0_54 = arith.constant 0 : index
    %c0_55 = arith.constant 0 : index
    %94 = vector.load %arg7[%c2, %c0_54, %c0_55] : memref<3x128x256xf32, #tpu.memory_space<vmem>>, vector<1x128x256xf32>
    %95 = vector.shape_cast %94 : vector<1x128x256xf32> to vector<128x256xf32>
    %cst_56 = arith.constant dense<0.000000e+00> : vector<16x256xf32>
    %96 = tpu.matmul %93, %95, %cst_56 {dimension_numbers = #tpu.dot_dimension_numbers<[1], [0], [0], [1], [0, 0, 1, 1], [], []>} : vector<16x128xf32>, vector<128x256xf32>, vector<16x256xf32> -> vector<16x256xf32>
    %97 = vector.extract_strided_slice %96 {offsets = [0, 0], sizes = [16, 128], strides = [1, 1]} : vector<16x256xf32> to vector<16x128xf32>
    %98 = vector.extract_strided_slice %96 {offsets = [0, 128], sizes = [16, 128], strides = [1, 1]} : vector<16x256xf32> to vector<16x128xf32>
    %99 = tpu.concatenate %97, %98 in 0 : vector<16x128xf32>, vector<16x128xf32> -> vector<32x128xf32>
    %100 = arith.truncf %99 : vector<32x128xf32> to vector<32x128xbf16>
    %cst_57 = arith.constant dense<0.000000e+00> : vector<32x128xf32>
    %101 = tpu.matmul %36, %100, %cst_57 {dimension_numbers = #tpu.dot_dimension_numbers<[0], [0], [1], [1], [0, 1, 1, 1], [], []>} : vector<32x32xbf16>, vector<32x128xbf16>, vector<32x128xf32> -> vector<32x128xf32>
    %c2_58 = arith.constant 2 : index
    %c0_59 = arith.constant 0 : index
    %c0_60 = arith.constant 0 : index
    %102 = vector.load %arg8[%c2_58, %c0_59, %c0_60] : memref<3x1x128xf32, #tpu.memory_space<vmem>>, vector<1x1x128xf32>
    %103 = vector.shape_cast %102 : vector<1x1x128xf32> to vector<1x128xf32>
    %104 = vector.broadcast %103 : vector<1x128xf32> to vector<32x128xf32>
    %105 = arith.addf %101, %104 : vector<32x128xf32>
    %cst_61 = arith.constant 0.000000e+00 : f32
    %106 = vector.broadcast %cst_61 : f32 to vector<32x128xf32>
    %107 = arith.maximumf %105, %106 : vector<32x128xf32>
    %c2_62 = arith.constant 2 : index
    %c0_63 = arith.constant 0 : index
    %c0_64 = arith.constant 0 : index
    %108 = vector.load %arg9[%c2_62, %c0_63, %c0_64] : memref<3x128x128xf32, #tpu.memory_space<vmem>>, vector<1x128x128xf32>
    %109 = vector.shape_cast %108 : vector<1x128x128xf32> to vector<128x128xf32>
    %cst_65 = arith.constant dense<0.000000e+00> : vector<32x128xf32>
    %110 = tpu.matmul %107, %109, %cst_65 {dimension_numbers = #tpu.dot_dimension_numbers<[1], [0], [0], [1], [0, 0, 1, 1], [], []>} : vector<32x128xf32>, vector<128x128xf32>, vector<32x128xf32> -> vector<32x128xf32>
    %c2_66 = arith.constant 2 : index
    %c0_67 = arith.constant 0 : index
    %c0_68 = arith.constant 0 : index
    %111 = vector.load %arg10[%c2_66, %c0_67, %c0_68] : memref<3x1x128xf32, #tpu.memory_space<vmem>>, vector<1x1x128xf32>
    %112 = vector.shape_cast %111 : vector<1x1x128xf32> to vector<1x128xf32>
    %113 = vector.broadcast %112 : vector<1x128xf32> to vector<32x128xf32>
    %114 = arith.addf %110, %113 : vector<32x128xf32>
    %115 = arith.truncf %114 : vector<32x128xf32> to vector<32x128xbf16>
    %cst_69 = arith.constant dense<0.000000e+00> : vector<16x128xf32>
    %116 = tpu.matmul %29, %115, %cst_69 {dimension_numbers = #tpu.dot_dimension_numbers<[1], [0], [0], [1], [0, 0, 1, 1], [], []>} : vector<16x32xbf16>, vector<32x128xbf16>, vector<16x128xf32> -> vector<16x128xf32>
    %cst_70 = arith.constant 0.000000e+00 : f32
    %117 = vector.broadcast %cst_70 : f32 to vector<16x128xf32>
    %118 = arith.cmpf ogt, %116, %117 : vector<16x128xf32>
    %cst_71 = arith.constant 0.00999999977 : f32
    %119 = vector.broadcast %cst_71 : f32 to vector<16x128xf32>
    %120 = arith.mulf %119, %116 : vector<16x128xf32>
    %121 = arith.select %118, %116, %120 : vector<16x128xi1>, vector<16x128xf32>
    %c0_72 = arith.constant 0 : index
    %c0_73 = arith.constant 0 : index
    %122 = vector.load %arg11[%c0_72, %c0_73] : memref<128x128xf32, #tpu.memory_space<vmem>>, vector<128x128xf32>
    %cst_74 = arith.constant dense<0.000000e+00> : vector<16x128xf32>
    %123 = tpu.matmul %121, %122, %cst_74 {dimension_numbers = #tpu.dot_dimension_numbers<[1], [0], [0], [1], [0, 0, 1, 1], [], []>} : vector<16x128xf32>, vector<128x128xf32>, vector<16x128xf32> -> vector<16x128xf32>
    %c0_75 = arith.constant 0 : index
    %c0_76 = arith.constant 0 : index
    %124 = vector.load %arg12[%c0_75, %c0_76] : memref<1x128xf32, #tpu.memory_space<vmem>>, vector<1x128xf32>
    %125 = vector.broadcast %124 : vector<1x128xf32> to vector<16x128xf32>
    %126 = arith.addf %123, %125 : vector<16x128xf32>
    %cst_77 = arith.constant 0.000000e+00 : f32
    %127 = vector.broadcast %cst_77 : f32 to vector<16x128xf32>
    %128 = arith.cmpf ogt, %126, %127 : vector<16x128xf32>
    %cst_78 = arith.constant 0.00999999977 : f32
    %129 = vector.broadcast %cst_78 : f32 to vector<16x128xf32>
    %130 = arith.mulf %129, %126 : vector<16x128xf32>
    %131 = arith.select %128, %126, %130 : vector<16x128xi1>, vector<16x128xf32>
    %c0_79 = arith.constant 0 : index
    %c0_80 = arith.constant 0 : index
    %132 = vector.load %arg13[%c0_79, %c0_80] : memref<128x128xf32, #tpu.memory_space<vmem>>, vector<128x128xf32>
    %cst_81 = arith.constant dense<0.000000e+00> : vector<16x128xf32>
    %133 = tpu.matmul %131, %132, %cst_81 {dimension_numbers = #tpu.dot_dimension_numbers<[1], [0], [0], [1], [0, 0, 1, 1], [], []>} : vector<16x128xf32>, vector<128x128xf32>, vector<16x128xf32> -> vector<16x128xf32>
    %c0_82 = arith.constant 0 : index
    %c0_83 = arith.constant 0 : index
    %134 = vector.load %arg14[%c0_82, %c0_83] : memref<1x128xf32, #tpu.memory_space<vmem>>, vector<1x128xf32>
    %135 = vector.broadcast %134 : vector<1x128xf32> to vector<16x128xf32>
    %136 = arith.addf %133, %135 : vector<16x128xf32>
    %c0_84 = arith.constant 0 : index
    %c0_85 = arith.constant 0 : index
    %137 = vector.load %arg15[%c0_84, %c0_85] : memref<16x128xf32, #tpu.memory_space<vmem>>, vector<16x128xf32>
    tpu.vector_store %arg15[%c0_84, %c0_85], %136 {strides = array<i32>} : memref<16x128xf32, #tpu.memory_space<vmem>>, vector<16x128xf32>,
    return
  }
}

</mosaic_0001>

<llo_original>
// kernel: clique_potential_gnn.1
$region0: #{clique_potential_gnn.1}
  #allocation0 [shape = 'u32[]', space=smem, size = 0x4, offset = 0x4, fixed_abs, tag = 'smem constant byte address 0x4 - core index']
  #allocation1 [shape = 'u32[144,128]{1,0:T(1,128)}', space=vmem, size = 0x12000, scoped, tag = 'internal scratch']
  %s0 = inlined_call_operand.vmem [shape: f32[16,1], index: 0, kind: input, shape index: {}]
  %s1 = inlined_call_operand.vmem [shape: s32[1,32], index: 1, kind: input, shape index: {}]
  %s2 = inlined_call_operand.vmem [shape: s32[1,32], index: 2, kind: input, shape index: {}]
  %s3 = inlined_call_operand.vmem [shape: f32[1,128], index: 3, kind: input, shape index: {}]
  %s4 = inlined_call_operand.vmem [shape: f32[1,128], index: 4, kind: input, shape index: {}]
  %s5 = inlined_call_operand.vmem [shape: f32[128,128], index: 5, kind: input, shape index: {}]
  %s6 = inlined_call_operand.vmem [shape: f32[1,128], index: 6, kind: input, shape index: {}]
  %s7 = inlined_call_operand.vmem [shape: f32[3,128,256], index: 7, kind: input, shape index: {}]
  %s8 = inlined_call_operand.vmem [shape: f32[3,1,128], index: 8, kind: input, shape index: {}]
  %s9 = inlined_call_operand.vmem [shape: f32[3,128,128], index: 9, kind: input, shape index: {}]
  %s10 = inlined_call_operand.vmem [shape: f32[3,1,128], index: 10, kind: input, shape index: {}]
  %s11 = inlined_call_operand.vmem [shape: f32[128,128], index: 11, kind: input, shape index: {}]
  %s12 = inlined_call_operand.vmem [shape: f32[1,128], index: 12, kind: input, shape index: {}]
  %s13 = inlined_call_operand.vmem [shape: f32[128,128], index: 13, kind: input, shape index: {}]
  %s14 = inlined_call_operand.vmem [shape: f32[1,128], index: 14, kind: input, shape index: {}]
  %s15 = inlined_call_operand.hbm [shape: f32[16,128], index: 15, kind: output, shape index: {}]
  %s16 = sld [smem:[#allocation0]]
  $region70: #{clique_potential_gnn.1} parent=0
    _
  %s18 = ssub.s32 1, %s16
  %s19 = scalar_select 0, %s18, %s16
  $region1: #{clique_potential_gnn.1} parent=0
    #allocation2 [shape = 'u8[8192]{0}', space=vmem, size = 0x2000, scoped, tag = 'output window, operand 0, single buffered']
    #allocation3 [shape = 's32[1]{0}', space=sflag, size = 0x4, scoped, tag = 'scoped memory for clique_potential_gnn.1']
    %20 = vsyncpa [#allocation3], 0
    // Predicated region
    $region2: #{clique_potential_gnn.1} parent=1 // pred_check
      _
    $region3: #{clique_potential_gnn.1} parent=1 // pred_check_branch
      %22 = sbr.rel (0) target = $region5
    $region4: #{clique_potential_gnn.1} parent=1 // pred_region
      _
    $region5: #{clique_potential_gnn.1} parent=1 // pred_fallthru
      _
    // Predicated region
    $region6: #{clique_potential_gnn.1} parent=1 // pred_check
      _
    $region7: #{clique_potential_gnn.1} parent=1 // pred_check_branch
      %24 = sbr.rel (0) target = $region9
    $region8: #{clique_potential_gnn.1} parent=1 // pred_region
      _
    $region9: #{clique_potential_gnn.1} parent=1 // pred_fallthru
      _
    // Predicated region
    $region10: #{clique_potential_gnn.1} parent=1 // pred_check
      _
    $region11: #{clique_potential_gnn.1} parent=1 // pred_check_branch
      %26 = sbr.rel (0) target = $region13
    $region12: #{clique_potential_gnn.1} parent=1 // pred_region
      _
    $region13: #{clique_potential_gnn.1} parent=1 // pred_fallthru
      _
    // Predicated region
    $region14: #{clique_potential_gnn.1} parent=1 // pred_check
      _
    $region15: #{clique_potential_gnn.1} parent=1 // pred_check_branch
      %28 = sbr.rel (0) target = $region17
    $region16: #{clique_potential_gnn.1} parent=1 // pred_region
      _
    $region17: #{clique_potential_gnn.1} parent=1 // pred_fallthru
      _
    // Predicated region
    $region18: #{clique_potential_gnn.1} parent=1 // pred_check
      _
    $region19: #{clique_potential_gnn.1} parent=1 // pred_check_branch
      %30 = sbr.rel (0) target = $region21
    $region20: #{clique_potential_gnn.1} parent=1 // pred_region
      _
    $region21: #{clique_potential_gnn.1} parent=1 // pred_fallthru
      _
    // Predicated region
    $region22: #{clique_potential_gnn.1} parent=1 // pred_check
      _
    $region23: #{clique_potential_gnn.1} parent=1 // pred_check_branch
      %32 = sbr.rel (0) target = $region25
    $region24: #{clique_potential_gnn.1} parent=1 // pred_region
      _
    $region25: #{clique_potential_gnn.1} parent=1 // pred_fallthru
      _
    // Predicated region
    $region26: #{clique_potential_gnn.1} parent=1 // pred_check
      _
    $region27: #{clique_potential_gnn.1} parent=1 // pred_check_branch
      %34 = sbr.rel (0) target = $region29
    $region28: #{clique_potential_gnn.1} parent=1 // pred_region
      _
    $region29: #{clique_potential_gnn.1} parent=1 // pred_fallthru
      _
    // Predicated region
    $region30: #{clique_potential_gnn.1} parent=1 // pred_check
      _
    $region31: #{clique_potential_gnn.1} parent=1 // pred_check_branch
      %36 = sbr.rel (0) target = $region33
    $region32: #{clique_potential_gnn.1} parent=1 // pred_region
      _
    $region33: #{clique_potential_gnn.1} parent=1 // pred_fallthru
      _
    // Predicated region
    $region34: #{clique_potential_gnn.1} parent=1 // pred_check
      _
    $region35: #{clique_potential_gnn.1} parent=1 // pred_check_branch
      %38 = sbr.rel (0) target = $region37
    $region36: #{clique_potential_gnn.1} parent=1 // pred_region
      _
    $region37: #{clique_potential_gnn.1} parent=1 // pred_fallthru
      _
    // Predicated region
    $region38: #{clique_potential_gnn.1} parent=1 // pred_check
      _
    $region39: #{clique_potential_gnn.1} parent=1 // pred_check_branch
      %40 = sbr.rel (0) target = $region41
    $region40: #{clique_potential_gnn.1} parent=1 // pred_region
      _
    $region41: #{clique_potential_gnn.1} parent=1 // pred_fallthru
      _
    // Predicated region
    $region42: #{clique_potential_gnn.1} parent=1 // pred_check
      _
    $region43: #{clique_potential_gnn.1} parent=1 // pred_check_branch
      %42 = sbr.rel (0) target = $region45
    $region44: #{clique_potential_gnn.1} parent=1 // pred_region
      _
    $region45: #{clique_potential_gnn.1} parent=1 // pred_fallthru
      _
    // Predicated region
    $region46: #{clique_potential_gnn.1} parent=1 // pred_check
      _
    $region47: #{clique_potential_gnn.1} parent=1 // pred_check_branch
      %44 = sbr.rel (0) target = $region49
    $region48: #{clique_potential_gnn.1} parent=1 // pred_region
      _
    $region49: #{clique_potential_gnn.1} parent=1 // pred_fallthru
      _
    // Predicated region
    $region50: #{clique_potential_gnn.1} parent=1 // pred_check
      _
    $region51: #{clique_potential_gnn.1} parent=1 // pred_check_branch
      %46 = sbr.rel (0) target = $region53
    $region52: #{clique_potential_gnn.1} parent=1 // pred_region
      _
    $region53: #{clique_potential_gnn.1} parent=1 // pred_fallthru
      _
    // Predicated region
    $region54: #{clique_potential_gnn.1} parent=1 // pred_check
      _
    $region55: #{clique_potential_gnn.1} parent=1 // pred_check_branch
      %48 = sbr.rel (0) target = $region57
    $region56: #{clique_potential_gnn.1} parent=1 // pred_region
      _
    $region57: #{clique_potential_gnn.1} parent=1 // pred_fallthru
      _
    // Predicated region
    $region58: #{clique_potential_gnn.1} parent=1 // pred_check
      _
    $region59: #{clique_potential_gnn.1} parent=1 // pred_check_branch
      %50 = sbr.rel (0) target = $region61
    $region60: #{clique_potential_gnn.1} parent=1 // pred_region
      _
    $region61: #{clique_potential_gnn.1} parent=1 // pred_fallthru
      _
    %v52 = vld [vmem:[%s0] sm:$0xff]
    %v53 = vld [vmem:[%s0 + $0x8] sm:$0xff]
    %v54 = vld [vmem:[%s3] sm:$0x1]
    %56 = vset.pattern.permute.xlu0 0
    %57 = vperm.xlu0 %56, %v52
    %v58 = vpop.permute.xlu0 %57
    %61 = vset.pattern.permute.xlu0 0
    %62 = vperm.xlu0 %61, %v53
    %v63 = vpop.permute.xlu0 %62
    %v66 = vlaneseq
    %v67 = vshrl.u32 %v66, 7
    %v68 = vsub.s32 0, %v67
    %v69 = vrot.slane %v54, %v68
    %v71 = vmul.f32 %v58, %v69
    %v72 = vmul.f32 %v63, %v69
    %v73 = vld [vmem:[%s4] sm:$0x1]
    %v75 = vlaneseq
    %v76 = vshrl.u32 %v75, 7
    %v77 = vsub.s32 0, %v76
    %v78 = vrot.slane %v73, %v77
    %v80 = vadd.f32 %v71, %v78
    %v81 = vadd.f32 %v72, %v78
    %vm82 = vcmp.gt.f32.partialorder %v80, 0.0
    %vm83 = vcmp.gt.f32.partialorder %v81, 0.0
    %v84 = vmul.f32 %v80, 0.01
    %v85 = vmul.f32 %v81, 0.01
    %v86 = vsel %vm82, %v80, %v84
    %v87 = vsel %vm83, %v81, %v85
    %v88 = vld [vmem:[%s5] sm:$0xff]
    %v89 = vld [vmem:[%s5 + $0x8] sm:$0xff]
    %v90 = vld [vmem:[%s5 + $0x10] sm:$0xff]
    %v91 = vld [vmem:[%s5 + $0x18] sm:$0xff]
    %v92 = vld [vmem:[%s5 + $0x20] sm:$0xff]
    %v93 = vld [vmem:[%s5 + $0x28] sm:$0xff]
    %v94 = vld [vmem:[%s5 + $0x30] sm:$0xff]
    %v95 = vld [vmem:[%s5 + $0x38] sm:$0xff]
    %v96 = vld [vmem:[%s5 + $0x40] sm:$0xff]
    %v97 = vld [vmem:[%s5 + $0x48] sm:$0xff]
    %v98 = vld [vmem:[%s5 + $0x50] sm:$0xff]
    %v99 = vld [vmem:[%s5 + $0x58] sm:$0xff]
    %v100 = vld [vmem:[%s5 + $0x60] sm:$0xff]
    %v101 = vld [vmem:[%s5 + $0x68] sm:$0xff]
    %v102 = vld [vmem:[%s5 + $0x70] sm:$0xff]
    %v103 = vld [vmem:[%s5 + $0x78] sm:$0xff]
    %v104 = vld [vmem:[%s6] sm:$0x1]
    %v106 = vlaneseq
    %v107 = vshrl.u32 %v106, 7
    %v108 = vsub.s32 0, %v107
    %v109 = vrot.slane %v104, %v108
    %111 = vmatprep.subr.mxu0 0.0
    %112 = vmatpush1.msra.mxu0 %v88
    %113 = vmatprep.subr.mxu0 0.0
    %114 = vmatpush1.msra.mxu0 %v89
    %115 = vmatprep.subr.mxu0 0.0
    %116 = vmatpush1.msra.mxu0 %v90
    %117 = vmatprep.subr.mxu0 0.0
    %118 = vmatpush1.msra.mxu0 %v91
    %119 = vmatprep.subr.mxu0 0.0
    %120 = vmatpush1.msra.mxu0 %v92
    %121 = vmatprep.subr.mxu0 0.0
    %122 = vmatpush1.msra.mxu0 %v93
    %123 = vmatprep.subr.mxu0 0.0
    %124 = vmatpush1.msra.mxu0 %v94
    %125 = vmatprep.subr.mxu0 0.0
    %126 = vmatpush1.msra.mxu0 %v95
    %127 = vmatprep.subr.mxu0 0.0
    %128 = vmatpush1.msra.mxu0 %v96
    %129 = vmatprep.subr.mxu0 0.0
    %130 = vmatpush1.msra.mxu0 %v97
    %131 = vmatprep.subr.mxu0 0.0
    %132 = vmatpush1.msra.mxu0 %v98
    %133 = vmatprep.subr.mxu0 0.0
    %134 = vmatpush1.msra.mxu0 %v99
    %135 = vmatprep.subr.mxu0 0.0
    %136 = vmatpush1.msra.mxu0 %v100
    %137 = vmatprep.subr.mxu0 0.0
    %138 = vmatpush1.msra.mxu0 %v101
    %139 = vmatprep.subr.mxu0 0.0
    %140 = vmatpush1.msra.mxu0 %v102
    %141 = vmatprep.subr.mxu0 0.0
    %142 = vmatpush1.msra.mxu0 %v103
    %143 = vmatprep.subr.mxu0 0.0
    %144 = vmatpush1.msra.mxu0 0.0
    %145 = vmatprep.subr.mxu0 0.0
    %146 = vmatpush1.msra.mxu0 0.0
    %147 = vmatprep.subr.mxu0 0.0
    %148 = vmatpush1.msra.mxu0 0.0
    %149 = vmatprep.subr.mxu0 0.0
    %150 = vmatpush1.msra.mxu0 0.0
    %151 = vmatprep.subr.mxu0 0.0
    %152 = vmatpush1.msra.mxu0 0.0
    %153 = vmatprep.subr.mxu0 0.0
    %154 = vmatpush1.msra.mxu0 0.0
    %155 = vmatprep.subr.mxu0 0.0
    %156 = vmatpush1.msra.mxu0 0.0
    %157 = vmatprep.subr.mxu0 0.0
    %158 = vmatpush1.msra.mxu0 0.0
    %159 = vmatprep.subr.mxu0 0.0
    %160 = vmatpush1.msra.mxu0 0.0
    %161 = vmatprep.subr.mxu0 0.0
    %162 = vmatpush1.msra.mxu0 0.0
    %163 = vmatprep.subr.mxu0 0.0
    %164 = vmatpush1.msra.mxu0 0.0
    %165 = vmatprep.subr.mxu0 0.0
    %166 = vmatpush1.msra.mxu0 0.0
    %167 = vmatprep.subr.mxu0 0.0
    %168 = vmatpush1.msra.mxu0 0.0
    %169 = vmatprep.subr.mxu0 0.0
    %170 = vmatpush1.msra.mxu0 0.0
    %171 = vmatprep.subr.mxu0 0.0
    %172 = vmatpush1.msra.mxu0 0.0
    %173 = vmatprep.subr.mxu0 0.0
    %174 = vmatpush1.msra.mxu0 0.0
    %175 = vmatprep.mubr.f32.mxu0 0.0
    %176 = vmatmul.mubr.f32.gmra.mrb[0].mxu0 %v86
    %v177 = vpop.f32.mrb[0].mxu0
    %v178 = vadd.f32 %v109, %v177
    %v179 = vpop.f32.mrb[0].mxu0
    %180 = vmatprep.mubr.f32.mxu0 0.0
    %181 = vmatmul.mubr.f32.gmra.mrb[0].mxu0 %v87
    %v182 = vpop.f32.mrb[0].mxu0
    %v183 = vadd.f32 %v109, %v182
    %v184 = vpop.f32.mrb[0].mxu0
    %185 = vdwg.mxu0
    %vm186 = vcmp.gt.f32.partialorder %v178, 0.0
    %vm187 = vcmp.gt.f32.partialorder %v183, 0.0
    %v188 = vmul.f32 %v178, 0.01
    %v189 = vmul.f32 %v183, 0.01
    %v190 = vsel %vm186, %v178, %v188
    %v191 = vsel %vm187, %v183, %v189
    %v192 = vlaneseq
    %v193 = vshrl.u32 %v192, 7
    %v194 = vadd.s32 %v193, 8
    %v195 = vld [vmem:[%s2] sm:$0x1]
    %v196 = vlaneseq
    %v197 = vshrl.u32 %v196, 7
    %v198 = vsub.s32 0, %v197
    %v199 = vrot.slane %v195, %v198
    %vm200 = vcmp.eq.s32.totalorder %v193, %v199
    %vm201 = vcmp.eq.s32.totalorder %v194, %v199
    %v202 = vsel %vm200, 1, 0
    %v203 = vsel %vm201, 1, 0
    %v204 = vcvt.s32.f32 %v202
    %v205 = vcvt.s32.f32 %v203
    %v206 = vpack.c.bf16 %v205, %v204
    %v207 = vld [vmem:[%s1] sm:$0x1]
    %v208 = vlaneseq
    %v209 = vshrl.u32 %v208, 7
    %v210 = vsub.s32 0, %v209
    %v211 = vrot.slane %v207, %v210
    %vm212 = vcmp.eq.s32.totalorder %v193, %v211
    %vm213 = vcmp.eq.s32.totalorder %v194, %v211
    %v214 = vsel %vm212, 1, 0
    %v215 = vsel %vm213, 1, 0
    %v216 = vcvt.s32.f32 %v214
    %v217 = vcvt.s32.f32 %v215
    %v218 = vpack.c.bf16 %v217, %v216
    %v219 = vld [vmem:[%s7] sm:$0xff]
    %v220 = vld [vmem:[%s7 + $0x8] sm:$0xff]
    %v221 = vld [vmem:[%s7 + $0x10] sm:$0xff]
    %v222 = vld [vmem:[%s7 + $0x18] sm:$0xff]
    %v223 = vld [vmem:[%s7 + $0x20] sm:$0xff]
    %v224 = vld [vmem:[%s7 + $0x28] sm:$0xff]
    %v225 = vld [vmem:[%s7 + $0x30] sm:$0xff]
    %v226 = vld [vmem:[%s7 + $0x38] sm:$0xff]
    %v227 = vld [vmem:[%s7 + $0x40] sm:$0xff]
    %v228 = vld [vmem:[%s7 + $0x48] sm:$0xff]
    %v229 = vld [vmem:[%s7 + $0x50] sm:$0xff]
    %v230 = vld [vmem:[%s7 + $0x58] sm:$0xff]
    %v231 = vld [vmem:[%s7 + $0x60] sm:$0xff]
    %v232 = vld [vmem:[%s7 + $0x68] sm:$0xff]
    %v233 = vld [vmem:[%s7 + $0x70] sm:$0xff]
    %v234 = vld [vmem:[%s7 + $0x78] sm:$0xff]
    %v235 = vld [vmem:[%s7 + $0x80] sm:$0xff]
    %v236 = vld [vmem:[%s7 + $0x88] sm:$0xff]
    %v237 = vld [vmem:[%s7 + $0x90] sm:$0xff]
    %v238 = vld [vmem:[%s7 + $0x98] sm:$0xff]
    %v239 = vld [vmem:[%s7 + $0xa0] sm:$0xff]
    %v240 = vld [vmem:[%s7 + $0xa8] sm:$0xff]
    %v241 = vld [vmem:[%s7 + $0xb0] sm:$0xff]
    %v242 = vld [vmem:[%s7 + $0xb8] sm:$0xff]
    %v243 = vld [vmem:[%s7 + $0xc0] sm:$0xff]
    %v244 = vld [vmem:[%s7 + $0xc8] sm:$0xff]
    %v245 = vld [vmem:[%s7 + $0xd0] sm:$0xff]
    %v246 = vld [vmem:[%s7 + $0xd8] sm:$0xff]
    %v247 = vld [vmem:[%s7 + $0xe0] sm:$0xff]
    %v248 = vld [vmem:[%s7 + $0xe8] sm:$0xff]
    %v249 = vld [vmem:[%s7 + $0xf0] sm:$0xff]
    %v250 = vld [vmem:[%s7 + $0xf8] sm:$0xff]
    %251 = vmatprep.subr.mxu0 %v220
    %252 = vmatpush1.msra.mxu0 %v219
    %253 = vmatprep.subr.mxu0 %v222
    %254 = vmatpush1.msra.mxu0 %v221
    %255 = vmatprep.subr.mxu0 %v224
    %256 = vmatpush1.msra.mxu0 %v223
    %257 = vmatprep.subr.mxu0 %v226
    %258 = vmatpush1.msra.mxu0 %v225
    %259 = vmatprep.subr.mxu0 %v228
    %260 = vmatpush1.msra.mxu0 %v227
    %261 = vmatprep.subr.mxu0 %v230
    %262 = vmatpush1.msra.mxu0 %v229
    %263 = vmatprep.subr.mxu0 %v232
    %264 = vmatpush1.msra.mxu0 %v231
    %265 = vmatprep.subr.mxu0 %v234
    %266 = vmatpush1.msra.mxu0 %v233
    %267 = vmatprep.subr.mxu0 %v236
    %268 = vmatpush1.msra.mxu0 %v235
    %269 = vmatprep.subr.mxu0 %v238
    %270 = vmatpush1.msra.mxu0 %v237
    %271 = vmatprep.subr.mxu0 %v240
    %272 = vmatpush1.msra.mxu0 %v239
    %273 = vmatprep.subr.mxu0 %v242
    %274 = vmatpush1.msra.mxu0 %v241
    %275 = vmatprep.subr.mxu0 %v244
    %276 = vmatpush1.msra.mxu0 %v243
    %277 = vmatprep.subr.mxu0 %v246
    %278 = vmatpush1.msra.mxu0 %v245
    %279 = vmatprep.subr.mxu0 %v248
    %280 = vmatpush1.msra.mxu0 %v247
    %281 = vmatprep.subr.mxu0 %v250
    %282 = vmatpush1.msra.mxu0 %v249
    %283 = vmatprep.subr.mxu0 0.0
    %284 = vmatpush1.msra.mxu0 0.0
    %285 = vmatprep.subr.mxu0 0.0
    %286 = vmatpush1.msra.mxu0 0.0
    %287 = vmatprep.subr.mxu0 0.0
    %288 = vmatpush1.msra.mxu0 0.0
    %289 = vmatprep.subr.mxu0 0.0
    %290 = vmatpush1.msra.mxu0 0.0
    %291 = vmatprep.subr.mxu0 0.0
    %292 = vmatpush1.msra.mxu0 0.0
    %293 = vmatprep.subr.mxu0 0.0
    %294 = vmatpush1.msra.mxu0 0.0
    %295 = vmatprep.subr.mxu0 0.0
    %296 = vmatpush1.msra.mxu0 0.0
    %297 = vmatprep.subr.mxu0 0.0
    %298 = vmatpush1.msra.mxu0 0.0
    %299 = vmatprep.subr.mxu0 0.0
    %300 = vmatpush1.msra.mxu0 0.0
    %301 = vmatprep.subr.mxu0 0.0
    %302 = vmatpush1.msra.mxu0 0.0
    %303 = vmatprep.subr.mxu0 0.0
    %304 = vmatpush1.msra.mxu0 0.0
    %305 = vmatprep.subr.mxu0 0.0
    %306 = vmatpush1.msra.mxu0 0.0
    %307 = vmatprep.subr.mxu0 0.0
    %308 = vmatpush1.msra.mxu0 0.0
    %309 = vmatprep.subr.mxu0 0.0
    %310 = vmatpush1.msra.mxu0 0.0
    %311 = vmatprep.subr.mxu0 0.0
    %312 = vmatpush1.msra.mxu0 0.0
    %313 = vmatprep.subr.mxu0 0.0
    %314 = vmatpush1.msra.mxu0 0.0
    %315 = vmatprep.mubr.f32.mxu0 0.0
    %316 = vmatmul.mubr.f32.gmra.mrb[0].mxu0 %v190
    %v317 = vpop.f32.mrb[0].mxu0
    %v318 = vadd.f32 0.0, %v317
    %v319 = vpop.f32.mrb[0].mxu0
    %v320 = vadd.f32 0.0, %v319
    %321 = vmatprep.mubr.f32.mxu0 0.0
    %322 = vmatmul.mubr.f32.gmra.mrb[0].mxu0 %v191
    %v323 = vpop.f32.mrb[0].mxu0
    %v324 = vadd.f32 0.0, %v323
    %v325 = vpop.f32.mrb[0].mxu0
    %v326 = vadd.f32 0.0, %v325
    %327 = vdwg.mxu0
    %v328 = vpack.c.bf16 %v324, %v318
    %v329 = vpack.c.bf16 %v326, %v320
    %v330 = vld [vmem:[%s8] sm:$0x1]
    %v332 = vlaneseq
    %v333 = vshrl.u32 %v332, 7
    %v334 = vsub.s32 0, %v333
    %v335 = vrot.slane %v330, %v334
    %337 = vxpose.xlu0.c.b16.start [1/8] %v206, 128
    %338 = vxpose.xlu0.c.b16.cont [2/8] %v218, 128
    %339 = vxpose.xlu0.c.b16.cont [3/8] 0, 128
    %340 = vxpose.xlu0.c.b16.cont [4/8] 0, 128
    %341 = vxpose.xlu0.c.b16.cont [5/8] 0, 128
    %342 = vxpose.xlu0.c.b16.cont [6/8] 0, 128
    %343 = vxpose.xlu0.c.b16.cont [7/8] 0, 128
    %344 = vxpose.xlu0.c.b16.end [8/8] 0, 128
    %v345 = vpop.trf.xlu0
    %v346 = vpop.trf.xlu0
    %v347 = vpop.trf.xlu0
    %v348 = vpop.trf.xlu0
    %v349 = vpop.trf.xlu0
    %v350 = vpop.trf.xlu0
    %v351 = vpop.trf.xlu0
    %v352 = vpop.trf.xlu0
    %vm353 = vcmask 261120
    %v355 = vsel %vm353, %v345, 0
    %v358 = vsel %vm353, %v346, 0
    %360 = vmatprep.subr.bf16.mxu0 0
    %361 = vmatpush1.bf16.msra.mxu0 %v328
    %362 = vmatprep.subr.bf16.mxu0 0
    %363 = vmatpush1.bf16.msra.mxu0 %v329
    %364 = vmatprep.subr.bf16.mxu0 0
    %365 = vmatpush1.bf16.msra.mxu0 0
    %366 = vmatprep.subr.bf16.mxu0 0
    %367 = vmatpush1.bf16.msra.mxu0 0
    %368 = vmatprep.subr.bf16.mxu0 0
    %369 = vmatpush1.bf16.msra.mxu0 0
    %370 = vmatprep.subr.bf16.mxu0 0
    %371 = vmatpush1.bf16.msra.mxu0 0
    %372 = vmatprep.subr.bf16.mxu0 0
    %373 = vmatpush1.bf16.msra.mxu0 0
    %374 = vmatprep.subr.bf16.mxu0 0
    %375 = vmatpush1.bf16.msra.mxu0 0
    %376 = vmatprep.subr.bf16.mxu0 0
    %377 = vmatpush1.bf16.msra.mxu0 0
    %378 = vmatprep.subr.bf16.mxu0 0
    %379 = vmatpush1.bf16.msra.mxu0 0
    %380 = vmatprep.subr.bf16.mxu0 0
    %381 = vmatpush1.bf16.msra.mxu0 0
    %382 = vmatprep.subr.bf16.mxu0 0
    %383 = vmatpush1.bf16.msra.mxu0 0
    %384 = vmatprep.subr.bf16.mxu0 0
    %385 = vmatpush1.bf16.msra.mxu0 0
    %386 = vmatprep.subr.bf16.mxu0 0
    %387 = vmatpush1.bf16.msra.mxu0 0
    %388 = vmatprep.subr.bf16.mxu0 0
    %389 = vmatpush1.bf16.msra.mxu0 0
    %390 = vmatprep.subr.bf16.mxu0 0
    %391 = vmatpush1.bf16.msra.mxu0 0
    %392 = vmatprep.mubr.bf16.mxu0 0
    %393 = vmatmul.mubr.bf16.gmra.mrb[0].mxu0 %v355
    %v394 = vpop.f32.mrb[0].mxu0
    %v395 = vadd.f32 %v335, %v394
    %v396 = vpop.f32.mrb[0].mxu0
    %v397 = vpop.f32.mrb[0].mxu0
    %v398 = vadd.f32 %v335, %v397
    %v399 = vpop.f32.mrb[0].mxu0
    %400 = vmatprep.mubr.bf16.mxu0 0
    %401 = vmatmul.mubr.bf16.gmra.mrb[0].mxu0 %v358
    %v402 = vpop.f32.mrb[0].mxu0
    %v403 = vadd.f32 %v335, %v402
    %v404 = vpop.f32.mrb[0].mxu0
    %v405 = vpop.f32.mrb[0].mxu0
    %v406 = vadd.f32 %v335, %v405
    %v407 = vpop.f32.mrb[0].mxu0
    %408 = vdwg.mxu0
    %v409 = vmax.f32 %v395, 0.0
    %v410 = vmax.f32 %v398, 0.0
    %v411 = vmax.f32 %v403, 0.0
    %v412 = vmax.f32 %v406, 0.0
    %v413 = vld [vmem:[%s9] sm:$0xff]
    %v414 = vld [vmem:[%s9 + $0x8] sm:$0xff]
    %v415 = vld [vmem:[%s9 + $0x10] sm:$0xff]
    %v416 = vld [vmem:[%s9 + $0x18] sm:$0xff]
    %v417 = vld [vmem:[%s9 + $0x20] sm:$0xff]
    %v418 = vld [vmem:[%s9 + $0x28] sm:$0xff]
    %v419 = vld [vmem:[%s9 + $0x30] sm:$0xff]
    %v420 = vld [vmem:[%s9 + $0x38] sm:$0xff]
    %v421 = vld [vmem:[%s9 + $0x40] sm:$0xff]
    %v422 = vld [vmem:[%s9 + $0x48] sm:$0xff]
    %v423 = vld [vmem:[%s9 + $0x50] sm:$0xff]
    %v424 = vld [vmem:[%s9 + $0x58] sm:$0xff]
    %v425 = vld [vmem:[%s9 + $0x60] sm:$0xff]
    %v426 = vld [vmem:[%s9 + $0x68] sm:$0xff]
    %v427 = vld [vmem:[%s9 + $0x70] sm:$0xff]
    %v428 = vld [vmem:[%s9 + $0x78] sm:$0xff]
    %v429 = vld [vmem:[%s10] sm:$0x1]
    %v431 = vlaneseq
    %v432 = vshrl.u32 %v431, 7
    %v433 = vsub.s32 0, %v432
    %v434 = vrot.slane %v429, %v433
    %436 = vmatprep.subr.mxu0 0.0
    %437 = vmatpush1.msra.mxu0 %v413
    %438 = vmatprep.subr.mxu0 0.0
    %439 = vmatpush1.msra.mxu0 %v414
    %440 = vmatprep.subr.mxu0 0.0
    %441 = vmatpush1.msra.mxu0 %v415
    %442 = vmatprep.subr.mxu0 0.0
    %443 = vmatpush1.msra.mxu0 %v416
    %444 = vmatprep.subr.mxu0 0.0
    %445 = vmatpush1.msra.mxu0 %v417
    %446 = vmatprep.subr.mxu0 0.0
    %447 = vmatpush1.msra.mxu0 %v418
    %448 = vmatprep.subr.mxu0 0.0
    %449 = vmatpush1.msra.mxu0 %v419
    %450 = vmatprep.subr.mxu0 0.0
    %451 = vmatpush1.msra.mxu0 %v420
    %452 = vmatprep.subr.mxu0 0.0
    %453 = vmatpush1.msra.mxu0 %v421
    %454 = vmatprep.subr.mxu0 0.0
    %455 = vmatpush1.msra.mxu0 %v422
    %456 = vmatprep.subr.mxu0 0.0
    %457 = vmatpush1.msra.mxu0 %v423
    %458 = vmatprep.subr.mxu0 0.0
    %459 = vmatpush1.msra.mxu0 %v424
    %460 = vmatprep.subr.mxu0 0.0
    %461 = vmatpush1.msra.mxu0 %v425
    %462 = vmatprep.subr.mxu0 0.0
    %463 = vmatpush1.msra.mxu0 %v426
    %464 = vmatprep.subr.mxu0 0.0
    %465 = vmatpush1.msra.mxu0 %v427
    %466 = vmatprep.subr.mxu0 0.0
    %467 = vmatpush1.msra.mxu0 %v428
    %468 = vmatprep.subr.mxu0 0.0
    %469 = vmatpush1.msra.mxu0 0.0
    %470 = vmatprep.subr.mxu0 0.0
    %471 = vmatpush1.msra.mxu0 0.0
    %472 = vmatprep.subr.mxu0 0.0
    %473 = vmatpush1.msra.mxu0 0.0
    %474 = vmatprep.subr.mxu0 0.0
    %475 = vmatpush1.msra.mxu0 0.0
    %476 = vmatprep.subr.mxu0 0.0
    %477 = vmatpush1.msra.mxu0 0.0
    %478 = vmatprep.subr.mxu0 0.0
    %479 = vmatpush1.msra.mxu0 0.0
    %480 = vmatprep.subr.mxu0 0.0
    %481 = vmatpush1.msra.mxu0 0.0
    %482 = vmatprep.subr.mxu0 0.0
    %483 = vmatpush1.msra.mxu0 0.0
    %484 = vmatprep.subr.mxu0 0.0
    %485 = vmatpush1.msra.mxu0 0.0
    %486 = vmatprep.subr.mxu0 0.0
    %487 = vmatpush1.msra.mxu0 0.0
    %488 = vmatprep.subr.mxu0 0.0
    %489 = vmatpush1.msra.mxu0 0.0
    %490 = vmatprep.subr.mxu0 0.0
    %491 = vmatpush1.msra.mxu0 0.0
    %492 = vmatprep.subr.mxu0 0.0
    %493 = vmatpush1.msra.mxu0 0.0
    %494 = vmatprep.subr.mxu0 0.0
    %495 = vmatpush1.msra.mxu0 0.0
    %496 = vmatprep.subr.mxu0 0.0
    %497 = vmatpush1.msra.mxu0 0.0
    %498 = vmatprep.subr.mxu0 0.0
    %499 = vmatpush1.msra.mxu0 0.0
    %500 = vmatprep.mubr.f32.mxu0 0.0
    %501 = vmatmul.mubr.f32.gmra.mrb[0].mxu0 %v409
    %v502 = vpop.f32.mrb[0].mxu0
    %v503 = vadd.f32 %v434, %v502
    %v504 = vpop.f32.mrb[0].mxu0
    %505 = vmatprep.mubr.f32.mxu0 0.0
    %506 = vmatmul.mubr.f32.gmra.mrb[0].mxu0 %v410
    %v507 = vpop.f32.mrb[0].mxu0
    %v508 = vadd.f32 %v434, %v507
    %v509 = vpop.f32.mrb[0].mxu0
    %510 = vmatprep.mubr.f32.mxu0 0.0
    %511 = vmatmul.mubr.f32.gmra.mrb[0].mxu0 %v411
    %v512 = vpop.f32.mrb[0].mxu0
    %v513 = vadd.f32 %v434, %v512
    %v514 = vpop.f32.mrb[0].mxu0
    %515 = vmatprep.mubr.f32.mxu0 0.0
    %516 = vmatmul.mubr.f32.gmra.mrb[0].mxu0 %v412
    %v517 = vpop.f32.mrb[0].mxu0
    %v518 = vadd.f32 %v434, %v517
    %v519 = vpop.f32.mrb[0].mxu0
    %520 = vdwg.mxu0
    %v521 = vpack.c.bf16 %v508, %v503
    %v522 = vpack.c.bf16 %v518, %v513
    %v524 = vsel %vm353, %v206, 0
    %526 = vmatprep.subr.bf16.mxu0 0
    %527 = vmatpush1.bf16.msra.mxu0 %v521
    %528 = vmatprep.subr.bf16.mxu0 0
    %529 = vmatpush1.bf16.msra.mxu0 %v522
    %530 = vmatprep.subr.bf16.mxu0 0
    %531 = vmatpush1.bf16.msra.mxu0 0
    %532 = vmatprep.subr.bf16.mxu0 0
    %533 = vmatpush1.bf16.msra.mxu0 0
    %534 = vmatprep.subr.bf16.mxu0 0
    %535 = vmatpush1.bf16.msra.mxu0 0
    %536 = vmatprep.subr.bf16.mxu0 0
    %537 = vmatpush1.bf16.msra.mxu0 0
    %538 = vmatprep.subr.bf16.mxu0 0
    %539 = vmatpush1.bf16.msra.mxu0 0
    %540 = vmatprep.subr.bf16.mxu0 0
    %541 = vmatpush1.bf16.msra.mxu0 0
    %542 = vmatprep.subr.bf16.mxu0 0
    %543 = vmatpush1.bf16.msra.mxu0 0
    %544 = vmatprep.subr.bf16.mxu0 0
    %545 = vmatpush1.bf16.msra.mxu0 0
    %546 = vmatprep.subr.bf16.mxu0 0
    %547 = vmatpush1.bf16.msra.mxu0 0
    %548 = vmatprep.subr.bf16.mxu0 0
    %549 = vmatpush1.bf16.msra.mxu0 0
    %550 = vmatprep.subr.bf16.mxu0 0
    %551 = vmatpush1.bf16.msra.mxu0 0
    %552 = vmatprep.subr.bf16.mxu0 0
    %553 = vmatpush1.bf16.msra.mxu0 0
    %554 = vmatprep.subr.bf16.mxu0 0
    %555 = vmatpush1.bf16.msra.mxu0 0
    %556 = vmatprep.subr.bf16.mxu0 0
    %557 = vmatpush1.bf16.msra.mxu0 0
    %558 = vmatprep.mubr.bf16.mxu0 0
    %559 = vmatmul.mubr.bf16.gmra.mrb[0].mxu0 %v524
    %v560 = vpop.f32.mrb[0].mxu0
    %v561 = vadd.f32 0.0, %v560
    %v562 = vpop.f32.mrb[0].mxu0
    %v563 = vpop.f32.mrb[0].mxu0
    %v564 = vadd.f32 0.0, %v563
    %v565 = vpop.f32.mrb[0].mxu0
    %566 = vdwg.mxu0
    %vm567 = vcmp.gt.f32.partialorder %v561, 0.0
    %vm568 = vcmp.gt.f32.partialorder %v564, 0.0
    %v569 = vmul.f32 %v561, 0.01
    %v570 = vmul.f32 %v564, 0.01
    %v571 = vsel %vm567, %v561, %v569
    %v572 = vsel %vm568, %v564, %v570
    %v573 = vadd.f32 %v571, %v190
    %v574 = vadd.f32 %v572, %v191
    %s575 = scalar_lea.vmem %s7, 256
    %v576 = vld [vmem:[%s575] sm:$0xff]
    %v577 = vld [vmem:[%s575 + $0x8] sm:$0xff]
    %v578 = vld [vmem:[%s575 + $0x10] sm:$0xff]
    %v579 = vld [vmem:[%s575 + $0x18] sm:$0xff]
    %v580 = vld [vmem:[%s575 + $0x20] sm:$0xff]
    %v581 = vld [vmem:[%s575 + $0x28] sm:$0xff]
    %v582 = vld [vmem:[%s575 + $0x30] sm:$0xff]
    %v583 = vld [vmem:[%s575 + $0x38] sm:$0xff]
    %v584 = vld [vmem:[%s575 + $0x40] sm:$0xff]
    %v585 = vld [vmem:[%s575 + $0x48] sm:$0xff]
    %v586 = vld [vmem:[%s575 + $0x50] sm:$0xff]
    %v587 = vld [vmem:[%s575 + $0x58] sm:$0xff]
    %v588 = vld [vmem:[%s575 + $0x60] sm:$0xff]
    %v589 = vld [vmem:[%s575 + $0x68] sm:$0xff]
    %v590 = vld [vmem:[%s575 + $0x70] sm:$0xff]
    %v591 = vld [vmem:[%s575 + $0x78] sm:$0xff]
    %v592 = vld [vmem:[%s575 + $0x80] sm:$0xff]
    %v593 = vld [vmem:[%s575 + $0x88] sm:$0xff]
    %v594 = vld [vmem:[%s575 + $0x90] sm:$0xff]
    %v595 = vld [vmem:[%s575 + $0x98] sm:$0xff]
    %v596 = vld [vmem:[%s575 + $0xa0] sm:$0xff]
    %v597 = vld [vmem:[%s575 + $0xa8] sm:$0xff]
    %v598 = vld [vmem:[%s575 + $0xb0] sm:$0xff]
    %v599 = vld [vmem:[%s575 + $0xb8] sm:$0xff]
    %v600 = vld [vmem:[%s575 + $0xc0] sm:$0xff]
    %v601 = vld [vmem:[%s575 + $0xc8] sm:$0xff]
    %v602 = vld [vmem:[%s575 + $0xd0] sm:$0xff]
    %v603 = vld [vmem:[%s575 + $0xd8] sm:$0xff]
    %v604 = vld [vmem:[%s575 + $0xe0] sm:$0xff]
    %v605 = vld [vmem:[%s575 + $0xe8] sm:$0xff]
    %v606 = vld [vmem:[%s575 + $0xf0] sm:$0xff]
    %v607 = vld [vmem:[%s575 + $0xf8] sm:$0xff]
    %608 = vmatprep.subr.mxu0 %v577
    %609 = vmatpush1.msra.mxu0 %v576
    %610 = vmatprep.subr.mxu0 %v579
    %611 = vmatpush1.msra.mxu0 %v578
    %612 = vmatprep.subr.mxu0 %v581
    %613 = vmatpush1.msra.mxu0 %v580
    %614 = vmatprep.subr.mxu0 %v583
    %615 = vmatpush1.msra.mxu0 %v582
    %616 = vmatprep.subr.mxu0 %v585
    %617 = vmatpush1.msra.mxu0 %v584
    %618 = vmatprep.subr.mxu0 %v587
    %619 = vmatpush1.msra.mxu0 %v586
    %620 = vmatprep.subr.mxu0 %v589
    %621 = vmatpush1.msra.mxu0 %v588
    %622 = vmatprep.subr.mxu0 %v591
    %623 = vmatpush1.msra.mxu0 %v590
    %624 = vmatprep.subr.mxu0 %v593
    %625 = vmatpush1.msra.mxu0 %v592
    %626 = vmatprep.subr.mxu0 %v595
    %627 = vmatpush1.msra.mxu0 %v594
    %628 = vmatprep.subr.mxu0 %v597
    %629 = vmatpush1.msra.mxu0 %v596
    %630 = vmatprep.subr.mxu0 %v599
    %631 = vmatpush1.msra.mxu0 %v598
    %632 = vmatprep.subr.mxu0 %v601
    %633 = vmatpush1.msra.mxu0 %v600
    %634 = vmatprep.subr.mxu0 %v603
    %635 = vmatpush1.msra.mxu0 %v602
    %636 = vmatprep.subr.mxu0 %v605
    %637 = vmatpush1.msra.mxu0 %v604
    %638 = vmatprep.subr.mxu0 %v607
    %639 = vmatpush1.msra.mxu0 %v606
    %640 = vmatprep.subr.mxu0 0.0
    %641 = vmatpush1.msra.mxu0 0.0
    %642 = vmatprep.subr.mxu0 0.0
    %643 = vmatpush1.msra.mxu0 0.0
    %644 = vmatprep.subr.mxu0 0.0
    %645 = vmatpush1.msra.mxu0 0.0
    %646 = vmatprep.subr.mxu0 0.0
    %647 = vmatpush1.msra.mxu0 0.0
    %648 = vmatprep.subr.mxu0 0.0
    %649 = vmatpush1.msra.mxu0 0.0
    %650 = vmatprep.subr.mxu0 0.0
    %651 = vmatpush1.msra.mxu0 0.0
    %652 = vmatprep.subr.mxu0 0.0
    %653 = vmatpush1.msra.mxu0 0.0
    %654 = vmatprep.subr.mxu0 0.0
    %655 = vmatpush1.msra.mxu0 0.0
    %656 = vmatprep.subr.mxu0 0.0
    %657 = vmatpush1.msra.mxu0 0.0
    %658 = vmatprep.subr.mxu0 0.0
    %659 = vmatpush1.msra.mxu0 0.0
    %660 = vmatprep.subr.mxu0 0.0
    %661 = vmatpush1.msra.mxu0 0.0
    %662 = vmatprep.subr.mxu0 0.0
    %663 = vmatpush1.msra.mxu0 0.0
    %664 = vmatprep.subr.mxu0 0.0
    %665 = vmatpush1.msra.mxu0 0.0
    %666 = vmatprep.subr.mxu0 0.0
    %667 = vmatpush1.msra.mxu0 0.0
    %668 = vmatprep.subr.mxu0 0.0
    %669 = vmatpush1.msra.mxu0 0.0
    %670 = vmatprep.subr.mxu0 0.0
    %671 = vmatpush1.msra.mxu0 0.0
    %672 = vmatprep.mubr.f32.mxu0 0.0
    %673 = vmatmul.mubr.f32.gmra.mrb[0].mxu0 %v573
    %v674 = vpop.f32.mrb[0].mxu0
    %v675 = vadd.f32 0.0, %v674
    %v676 = vpop.f32.mrb[0].mxu0
    %v677 = vadd.f32 0.0, %v676
    %678 = vmatprep.mubr.f32.mxu0 0.0
    %679 = vmatmul.mubr.f32.gmra.mrb[0].mxu0 %v574
    %v680 = vpop.f32.mrb[0].mxu0
    %v681 = vadd.f32 0.0, %v680
    %v682 = vpop.f32.mrb[0].mxu0
    %v683 = vadd.f32 0.0, %v682
    %684 = vdwg.mxu0
    %v685 = vpack.c.bf16 %v681, %v675
    %v686 = vpack.c.bf16 %v683, %v677
    %s687 = scalar_lea.vmem %s8, 1
    %v688 = vld [vmem:[%s687] sm:$0x1]
    %v690 = vlaneseq
    %v691 = vshrl.u32 %v690, 7
    %v692 = vsub.s32 0, %v691
    %v693 = vrot.slane %v688, %v692
    %695 = vmatprep.subr.bf16.mxu0 0
    %696 = vmatpush1.bf16.msra.mxu0 %v685
    %697 = vmatprep.subr.bf16.mxu0 0
    %698 = vmatpush1.bf16.msra.mxu0 %v686
    %699 = vmatprep.subr.bf16.mxu0 0
    %700 = vmatpush1.bf16.msra.mxu0 0
    %701 = vmatprep.subr.bf16.mxu0 0
    %702 = vmatpush1.bf16.msra.mxu0 0
    %703 = vmatprep.subr.bf16.mxu0 0
    %704 = vmatpush1.bf16.msra.mxu0 0
    %705 = vmatprep.subr.bf16.mxu0 0
    %706 = vmatpush1.bf16.msra.mxu0 0
    %707 = vmatprep.subr.bf16.mxu0 0
    %708 = vmatpush1.bf16.msra.mxu0 0
    %709 = vmatprep.subr.bf16.mxu0 0
    %710 = vmatpush1.bf16.msra.mxu0 0
    %711 = vmatprep.subr.bf16.mxu0 0
    %712 = vmatpush1.bf16.msra.mxu0 0
    %713 = vmatprep.subr.bf16.mxu0 0
    %714 = vmatpush1.bf16.msra.mxu0 0
    %715 = vmatprep.subr.bf16.mxu0 0
    %716 = vmatpush1.bf16.msra.mxu0 0
    %717 = vmatprep.subr.bf16.mxu0 0
    %718 = vmatpush1.bf16.msra.mxu0 0
    %719 = vmatprep.subr.bf16.mxu0 0
    %720 = vmatpush1.bf16.msra.mxu0 0
    %721 = vmatprep.subr.bf16.mxu0 0
    %722 = vmatpush1.bf16.msra.mxu0 0
    %723 = vmatprep.subr.bf16.mxu0 0
    %724 = vmatpush1.bf16.msra.mxu0 0
    %725 = vmatprep.subr.bf16.mxu0 0
    %726 = vmatpush1.bf16.msra.mxu0 0
    %727 = vmatprep.mubr.bf16.mxu0 0
    %728 = vmatmul.mubr.bf16.gmra.mrb[0].mxu0 %v355
    %v729 = vpop.f32.mrb[0].mxu0
    %v730 = vadd.f32 %v693, %v729
    %v731 = vpop.f32.mrb[0].mxu0
    %v732 = vpop.f32.mrb[0].mxu0
    %v733 = vadd.f32 %v693, %v732
    %v734 = vpop.f32.mrb[0].mxu0
    %735 = vmatprep.mubr.bf16.mxu0 0
    %736 = vmatmul.mubr.bf16.gmra.mrb[0].mxu0 %v358
    %v737 = vpop.f32.mrb[0].mxu0
    %v738 = vadd.f32 %v693, %v737
    %v739 = vpop.f32.mrb[0].mxu0
    %v740 = vpop.f32.mrb[0].mxu0
    %v741 = vadd.f32 %v693, %v740
    %v742 = vpop.f32.mrb[0].mxu0
    %743 = vdwg.mxu0
    %v744 = vmax.f32 %v730, 0.0
    %v745 = vmax.f32 %v733, 0.0
    %v746 = vmax.f32 %v738, 0.0
    %v747 = vmax.f32 %v741, 0.0
    %s748 = scalar_lea.vmem %s9, 128
    %v749 = vld [vmem:[%s748] sm:$0xff]
    %v750 = vld [vmem:[%s748 + $0x8] sm:$0xff]
    %v751 = vld [vmem:[%s748 + $0x10] sm:$0xff]
    %v752 = vld [vmem:[%s748 + $0x18] sm:$0xff]
    %v753 = vld [vmem:[%s748 + $0x20] sm:$0xff]
    %v754 = vld [vmem:[%s748 + $0x28] sm:$0xff]
    %v755 = vld [vmem:[%s748 + $0x30] sm:$0xff]
    %v756 = vld [vmem:[%s748 + $0x38] sm:$0xff]
    %v757 = vld [vmem:[%s748 + $0x40] sm:$0xff]
    %v758 = vld [vmem:[%s748 + $0x48] sm:$0xff]
    %v759 = vld [vmem:[%s748 + $0x50] sm:$0xff]
    %v760 = vld [vmem:[%s748 + $0x58] sm:$0xff]
    %v761 = vld [vmem:[%s748 + $0x60] sm:$0xff]
    %v762 = vld [vmem:[%s748 + $0x68] sm:$0xff]
    %v763 = vld [vmem:[%s748 + $0x70] sm:$0xff]
    %v764 = vld [vmem:[%s748 + $0x78] sm:$0xff]
    %s765 = scalar_lea.vmem %s10, 1
    %v766 = vld [vmem:[%s765] sm:$0x1]
    %v768 = vlaneseq
    %v769 = vshrl.u32 %v768, 7
    %v770 = vsub.s32 0, %v769
    %v771 = vrot.slane %v766, %v770
    %773 = vmatprep.subr.mxu0 0.0
    %774 = vmatpush1.msra.mxu0 %v749
    %775 = vmatprep.subr.mxu0 0.0
    %776 = vmatpush1.msra.mxu0 %v750
    %777 = vmatprep.subr.mxu0 0.0
    %778 = vmatpush1.msra.mxu0 %v751
    %779 = vmatprep.subr.mxu0 0.0
    %780 = vmatpush1.msra.mxu0 %v752
    %781 = vmatprep.subr.mxu0 0.0
    %782 = vmatpush1.msra.mxu0 %v753
    %783 = vmatprep.subr.mxu0 0.0
    %784 = vmatpush1.msra.mxu0 %v754
    %785 = vmatprep.subr.mxu0 0.0
    %786 = vmatpush1.msra.mxu0 %v755
    %787 = vmatprep.subr.mxu0 0.0
    %788 = vmatpush1.msra.mxu0 %v756
    %789 = vmatprep.subr.mxu0 0.0
    %790 = vmatpush1.msra.mxu0 %v757
    %791 = vmatprep.subr.mxu0 0.0
    %792 = vmatpush1.msra.mxu0 %v758
    %793 = vmatprep.subr.mxu0 0.0
    %794 = vmatpush1.msra.mxu0 %v759
    %795 = vmatprep.subr.mxu0 0.0
    %796 = vmatpush1.msra.mxu0 %v760
    %797 = vmatprep.subr.mxu0 0.0
    %798 = vmatpush1.msra.mxu0 %v761
    %799 = vmatprep.subr.mxu0 0.0
    %800 = vmatpush1.msra.mxu0 %v762
    %801 = vmatprep.subr.mxu0 0.0
    %802 = vmatpush1.msra.mxu0 %v763
    %803 = vmatprep.subr.mxu0 0.0
    %804 = vmatpush1.msra.mxu0 %v764
    %805 = vmatprep.subr.mxu0 0.0
    %806 = vmatpush1.msra.mxu0 0.0
    %807 = vmatprep.subr.mxu0 0.0
    %808 = vmatpush1.msra.mxu0 0.0
    %809 = vmatprep.subr.mxu0 0.0
    %810 = vmatpush1.msra.mxu0 0.0
    %811 = vmatprep.subr.mxu0 0.0
    %812 = vmatpush1.msra.mxu0 0.0
    %813 = vmatprep.subr.mxu0 0.0
    %814 = vmatpush1.msra.mxu0 0.0
    %815 = vmatprep.subr.mxu0 0.0
    %816 = vmatpush1.msra.mxu0 0.0
    %817 = vmatprep.subr.mxu0 0.0
    %818 = vmatpush1.msra.mxu0 0.0
    %819 = vmatprep.subr.mxu0 0.0
    %820 = vmatpush1.msra.mxu0 0.0
    %821 = vmatprep.subr.mxu0 0.0
    %822 = vmatpush1.msra.mxu0 0.0
    %823 = vmatprep.subr.mxu0 0.0
    %824 = vmatpush1.msra.mxu0 0.0
    %825 = vmatprep.subr.mxu0 0.0
    %826 = vmatpush1.msra.mxu0 0.0
    %827 = vmatprep.subr.mxu0 0.0
    %828 = vmatpush1.msra.mxu0 0.0
    %829 = vmatprep.subr.mxu0 0.0
    %830 = vmatpush1.msra.mxu0 0.0
    %831 = vmatprep.subr.mxu0 0.0
    %832 = vmatpush1.msra.mxu0 0.0
    %833 = vmatprep.subr.mxu0 0.0
    %834 = vmatpush1.msra.mxu0 0.0
    %835 = vmatprep.subr.mxu0 0.0
    %836 = vmatpush1.msra.mxu0 0.0
    %837 = vmatprep.mubr.f32.mxu0 0.0
    %838 = vmatmul.mubr.f32.gmra.mrb[0].mxu0 %v744
    %v839 = vpop.f32.mrb[0].mxu0
    %v840 = vadd.f32 %v771, %v839
    %v841 = vpop.f32.mrb[0].mxu0
    %842 = vmatprep.mubr.f32.mxu0 0.0
    %843 = vmatmul.mubr.f32.gmra.mrb[0].mxu0 %v745
    %v844 = vpop.f32.mrb[0].mxu0
    %v845 = vadd.f32 %v771, %v844
    %v846 = vpop.f32.mrb[0].mxu0
    %847 = vmatprep.mubr.f32.mxu0 0.0
    %848 = vmatmul.mubr.f32.gmra.mrb[0].mxu0 %v746
    %v849 = vpop.f32.mrb[0].mxu0
    %v850 = vadd.f32 %v771, %v849
    %v851 = vpop.f32.mrb[0].mxu0
    %852 = vmatprep.mubr.f32.mxu0 0.0
    %853 = vmatmul.mubr.f32.gmra.mrb[0].mxu0 %v747
    %v854 = vpop.f32.mrb[0].mxu0
    %v855 = vadd.f32 %v771, %v854
    %v856 = vpop.f32.mrb[0].mxu0
    %857 = vdwg.mxu0
    %v858 = vpack.c.bf16 %v845, %v840
    %v859 = vpack.c.bf16 %v855, %v850
    %860 = vmatprep.subr.bf16.mxu0 0
    %861 = vmatpush1.bf16.msra.mxu0 %v858
    %862 = vmatprep.subr.bf16.mxu0 0
    %863 = vmatpush1.bf16.msra.mxu0 %v859
    %864 = vmatprep.subr.bf16.mxu0 0
    %865 = vmatpush1.bf16.msra.mxu0 0
    %866 = vmatprep.subr.bf16.mxu0 0
    %867 = vmatpush1.bf16.msra.mxu0 0
    %868 = vmatprep.subr.bf16.mxu0 0
    %869 = vmatpush1.bf16.msra.mxu0 0
    %870 = vmatprep.subr.bf16.mxu0 0
    %871 = vmatpush1.bf16.msra.mxu0 0
    %872 = vmatprep.subr.bf16.mxu0 0
    %873 = vmatpush1.bf16.msra.mxu0 0
    %874 = vmatprep.subr.bf16.mxu0 0
    %875 = vmatpush1.bf16.msra.mxu0 0
    %876 = vmatprep.subr.bf16.mxu0 0
    %877 = vmatpush1.bf16.msra.mxu0 0
    %878 = vmatprep.subr.bf16.mxu0 0
    %879 = vmatpush1.bf16.msra.mxu0 0
    %880 = vmatprep.subr.bf16.mxu0 0
    %881 = vmatpush1.bf16.msra.mxu0 0
    %882 = vmatprep.subr.bf16.mxu0 0
    %883 = vmatpush1.bf16.msra.mxu0 0
    %884 = vmatprep.subr.bf16.mxu0 0
    %885 = vmatpush1.bf16.msra.mxu0 0
    %886 = vmatprep.subr.bf16.mxu0 0
    %887 = vmatpush1.bf16.msra.mxu0 0
    %888 = vmatprep.subr.bf16.mxu0 0
    %889 = vmatpush1.bf16.msra.mxu0 0
    %890 = vmatprep.subr.bf16.mxu0 0
    %891 = vmatpush1.bf16.msra.mxu0 0
    %892 = vmatprep.mubr.bf16.mxu0 0
    %893 = vmatmul.mubr.bf16.gmra.mrb[0].mxu0 %v524
    %v894 = vpop.f32.mrb[0].mxu0
    %v895 = vadd.f32 0.0, %v894
    %v896 = vpop.f32.mrb[0].mxu0
    %v897 = vpop.f32.mrb[0].mxu0
    %v898 = vadd.f32 0.0, %v897
    %v899 = vpop.f32.mrb[0].mxu0
    %900 = vdwg.mxu0
    %vm901 = vcmp.gt.f32.partialorder %v895, 0.0
    %vm902 = vcmp.gt.f32.partialorder %v898, 0.0
    %v903 = vmul.f32 %v895, 0.01
    %v904 = vmul.f32 %v898, 0.01
    %v905 = vsel %vm901, %v895, %v903
    %v906 = vsel %vm902, %v898, %v904
    %s907 = scalar_lea.vmem %s7, 512
    %v908 = vld [vmem:[%s907] sm:$0xff]
    %v909 = vld [vmem:[%s907 + $0x8] sm:$0xff]
    %v910 = vld [vmem:[%s907 + $0x10] sm:$0xff]
    %v911 = vld [vmem:[%s907 + $0x18] sm:$0xff]
    %v912 = vld [vmem:[%s907 + $0x20] sm:$0xff]
    %v913 = vld [vmem:[%s907 + $0x28] sm:$0xff]
    %v914 = vld [vmem:[%s907 + $0x30] sm:$0xff]
    %v915 = vld [vmem:[%s907 + $0x38] sm:$0xff]
    %v916 = vld [vmem:[%s907 + $0x40] sm:$0xff]
    %v917 = vld [vmem:[%s907 + $0x48] sm:$0xff]
    %v918 = vld [vmem:[%s907 + $0x50] sm:$0xff]
    %v919 = vld [vmem:[%s907 + $0x58] sm:$0xff]
    %v920 = vld [vmem:[%s907 + $0x60] sm:$0xff]
    %v921 = vld [vmem:[%s907 + $0x68] sm:$0xff]
    %v922 = vld [vmem:[%s907 + $0x70] sm:$0xff]
    %v923 = vld [vmem:[%s907 + $0x78] sm:$0xff]
    %v924 = vld [vmem:[%s907 + $0x80] sm:$0xff]
    %v925 = vld [vmem:[%s907 + $0x88] sm:$0xff]
    %v926 = vld [vmem:[%s907 + $0x90] sm:$0xff]
    %v927 = vld [vmem:[%s907 + $0x98] sm:$0xff]
    %v928 = vld [vmem:[%s907 + $0xa0] sm:$0xff]
    %v929 = vld [vmem:[%s907 + $0xa8] sm:$0xff]
    %v930 = vld [vmem:[%s907 + $0xb0] sm:$0xff]
    %v931 = vld [vmem:[%s907 + $0xb8] sm:$0xff]
    %v932 = vld [vmem:[%s907 + $0xc0] sm:$0xff]
    %v933 = vld [vmem:[%s907 + $0xc8] sm:$0xff]
    %v934 = vld [vmem:[%s907 + $0xd0] sm:$0xff]
    %v935 = vld [vmem:[%s907 + $0xd8] sm:$0xff]
    %v936 = vld [vmem:[%s907 + $0xe0] sm:$0xff]
    %v937 = vld [vmem:[%s907 + $0xe8] sm:$0xff]
    %v938 = vld [vmem:[%s907 + $0xf0] sm:$0xff]
    %v939 = vld [vmem:[%s907 + $0xf8] sm:$0xff]
    %940 = vmatprep.subr.mxu0 %v909
    %941 = vmatpush1.msra.mxu0 %v908
    %942 = vmatprep.subr.mxu0 %v911
    %943 = vmatpush1.msra.mxu0 %v910
    %944 = vmatprep.subr.mxu0 %v913
    %945 = vmatpush1.msra.mxu0 %v912
    %946 = vmatprep.subr.mxu0 %v915
    %947 = vmatpush1.msra.mxu0 %v914
    %948 = vmatprep.subr.mxu0 %v917
    %949 = vmatpush1.msra.mxu0 %v916
    %950 = vmatprep.subr.mxu0 %v919
    %951 = vmatpush1.msra.mxu0 %v918
    %952 = vmatprep.subr.mxu0 %v921
    %953 = vmatpush1.msra.mxu0 %v920
    %954 = vmatprep.subr.mxu0 %v923
    %955 = vmatpush1.msra.mxu0 %v922
    %956 = vmatprep.subr.mxu0 %v925
    %957 = vmatpush1.msra.mxu0 %v924
    %958 = vmatprep.subr.mxu0 %v927
    %959 = vmatpush1.msra.mxu0 %v926
    %960 = vmatprep.subr.mxu0 %v929
    %961 = vmatpush1.msra.mxu0 %v928
    %962 = vmatprep.subr.mxu0 %v931
    %963 = vmatpush1.msra.mxu0 %v930
    %964 = vmatprep.subr.mxu0 %v933
    %965 = vmatpush1.msra.mxu0 %v932
    %966 = vmatprep.subr.mxu0 %v935
    %967 = vmatpush1.msra.mxu0 %v934
    %968 = vmatprep.subr.mxu0 %v937
    %969 = vmatpush1.msra.mxu0 %v936
    %970 = vmatprep.subr.mxu0 %v939
    %971 = vmatpush1.msra.mxu0 %v938
    %972 = vmatprep.subr.mxu0 0.0
    %973 = vmatpush1.msra.mxu0 0.0
    %974 = vmatprep.subr.mxu0 0.0
    %975 = vmatpush1.msra.mxu0 0.0
    %976 = vmatprep.subr.mxu0 0.0
    %977 = vmatpush1.msra.mxu0 0.0
    %978 = vmatprep.subr.mxu0 0.0
    %979 = vmatpush1.msra.mxu0 0.0
    %980 = vmatprep.subr.mxu0 0.0
    %981 = vmatpush1.msra.mxu0 0.0
    %982 = vmatprep.subr.mxu0 0.0
    %983 = vmatpush1.msra.mxu0 0.0
    %984 = vmatprep.subr.mxu0 0.0
    %985 = vmatpush1.msra.mxu0 0.0
    %986 = vmatprep.subr.mxu0 0.0
    %987 = vmatpush1.msra.mxu0 0.0
    %988 = vmatprep.subr.mxu0 0.0
    %989 = vmatpush1.msra.mxu0 0.0
    %990 = vmatprep.subr.mxu0 0.0
    %991 = vmatpush1.msra.mxu0 0.0
    %992 = vmatprep.subr.mxu0 0.0
    %993 = vmatpush1.msra.mxu0 0.0
    %994 = vmatprep.subr.mxu0 0.0
    %995 = vmatpush1.msra.mxu0 0.0
    %996 = vmatprep.subr.mxu0 0.0
    %997 = vmatpush1.msra.mxu0 0.0
    %998 = vmatprep.subr.mxu0 0.0
    %999 = vmatpush1.msra.mxu0 0.0
    %1000 = vmatprep.subr.mxu0 0.0
    %1001 = vmatpush1.msra.mxu0 0.0
    %1002 = vmatprep.subr.mxu0 0.0
    %1003 = vmatpush1.msra.mxu0 0.0
    %1004 = vmatprep.mubr.f32.mxu0 0.0
    %1005 = vmatmul.mubr.f32.gmra.mrb[0].mxu0 %v905
    %v1006 = vpop.f32.mrb[0].mxu0
    %v1007 = vadd.f32 0.0, %v1006
    %v1008 = vpop.f32.mrb[0].mxu0
    %v1009 = vadd.f32 0.0, %v1008
    %1010 = vmatprep.mubr.f32.mxu0 0.0
    %1011 = vmatmul.mubr.f32.gmra.mrb[0].mxu0 %v906
    %v1012 = vpop.f32.mrb[0].mxu0
    %v1013 = vadd.f32 0.0, %v1012
    %v1014 = vpop.f32.mrb[0].mxu0
    %v1015 = vadd.f32 0.0, %v1014
    %1016 = vdwg.mxu0
    %v1017 = vpack.c.bf16 %v1013, %v1007
    %v1018 = vpack.c.bf16 %v1015, %v1009
    %s1019 = scalar_lea.vmem %s8, 2
    %v1020 = vld [vmem:[%s1019] sm:$0x1]
    %v1022 = vlaneseq
    %v1023 = vshrl.u32 %v1022, 7
    %v1024 = vsub.s32 0, %v1023
    %v1025 = vrot.slane %v1020, %v1024
    %1027 = vmatprep.subr.bf16.mxu0 0
    %1028 = vmatpush1.bf16.msra.mxu0 %v1017
    %1029 = vmatprep.subr.bf16.mxu0 0
    %1030 = vmatpush1.bf16.msra.mxu0 %v1018
    %1031 = vmatprep.subr.bf16.mxu0 0
    %1032 = vmatpush1.bf16.msra.mxu0 0
    %1033 = vmatprep.subr.bf16.mxu0 0
    %1034 = vmatpush1.bf16.msra.mxu0 0
    %1035 = vmatprep.subr.bf16.mxu0 0
    %1036 = vmatpush1.bf16.msra.mxu0 0
    %1037 = vmatprep.subr.bf16.mxu0 0
    %1038 = vmatpush1.bf16.msra.mxu0 0
    %1039 = vmatprep.subr.bf16.mxu0 0
    %1040 = vmatpush1.bf16.msra.mxu0 0
    %1041 = vmatprep.subr.bf16.mxu0 0
    %1042 = vmatpush1.bf16.msra.mxu0 0
    %1043 = vmatprep.subr.bf16.mxu0 0
    %1044 = vmatpush1.bf16.msra.mxu0 0
    %1045 = vmatprep.subr.bf16.mxu0 0
    %1046 = vmatpush1.bf16.msra.mxu0 0
    %1047 = vmatprep.subr.bf16.mxu0 0
    %1048 = vmatpush1.bf16.msra.mxu0 0
    %1049 = vmatprep.subr.bf16.mxu0 0
    %1050 = vmatpush1.bf16.msra.mxu0 0
    %1051 = vmatprep.subr.bf16.mxu0 0
    %1052 = vmatpush1.bf16.msra.mxu0 0
    %1053 = vmatprep.subr.bf16.mxu0 0
    %1054 = vmatpush1.bf16.msra.mxu0 0
    %1055 = vmatprep.subr.bf16.mxu0 0
    %1056 = vmatpush1.bf16.msra.mxu0 0
    %1057 = vmatprep.subr.bf16.mxu0 0
    %1058 = vmatpush1.bf16.msra.mxu0 0
    %1059 = vmatprep.mubr.bf16.mxu0 0
    %1060 = vmatmul.mubr.bf16.gmra.mrb[0].mxu0 %v355
    %v1061 = vpop.f32.mrb[0].mxu0
    %v1062 = vadd.f32 %v1025, %v1061
    %v1063 = vpop.f32.mrb[0].mxu0
    %v1064 = vpop.f32.mrb[0].mxu0
    %v1065 = vadd.f32 %v1025, %v1064
    %v1066 = vpop.f32.mrb[0].mxu0
    %1067 = vmatprep.mubr.bf16.mxu0 0
    %1068 = vmatmul.mubr.bf16.gmra.mrb[0].mxu0 %v358
    %v1069 = vpop.f32.mrb[0].mxu0
    %v1070 = vadd.f32 %v1025, %v1069
    %v1071 = vpop.f32.mrb[0].mxu0
    %v1072 = vpop.f32.mrb[0].mxu0
    %v1073 = vadd.f32 %v1025, %v1072
    %v1074 = vpop.f32.mrb[0].mxu0
    %1075 = vdwg.mxu0
    %v1076 = vmax.f32 %v1062, 0.0
    %v1077 = vmax.f32 %v1065, 0.0
    %v1078 = vmax.f32 %v1070, 0.0
    %v1079 = vmax.f32 %v1073, 0.0
    %s1080 = scalar_lea.vmem %s9, 256
    %v1081 = vld [vmem:[%s1080] sm:$0xff]
    %v1082 = vld [vmem:[%s1080 + $0x8] sm:$0xff]
    %v1083 = vld [vmem:[%s1080 + $0x10] sm:$0xff]
    %v1084 = vld [vmem:[%s1080 + $0x18] sm:$0xff]
    %v1085 = vld [vmem:[%s1080 + $0x20] sm:$0xff]
    %v1086 = vld [vmem:[%s1080 + $0x28] sm:$0xff]
    %v1087 = vld [vmem:[%s1080 + $0x30] sm:$0xff]
    %v1088 = vld [vmem:[%s1080 + $0x38] sm:$0xff]
    %v1089 = vld [vmem:[%s1080 + $0x40] sm:$0xff]
    %v1090 = vld [vmem:[%s1080 + $0x48] sm:$0xff]
    %v1091 = vld [vmem:[%s1080 + $0x50] sm:$0xff]
    %v1092 = vld [vmem:[%s1080 + $0x58] sm:$0xff]
    %v1093 = vld [vmem:[%s1080 + $0x60] sm:$0xff]
    %v1094 = vld [vmem:[%s1080 + $0x68] sm:$0xff]
    %v1095 = vld [vmem:[%s1080 + $0x70] sm:$0xff]
    %v1096 = vld [vmem:[%s1080 + $0x78] sm:$0xff]
    %s1097 = scalar_lea.vmem %s10, 2
    %v1098 = vld [vmem:[%s1097] sm:$0x1]
    %v1100 = vlaneseq
    %v1101 = vshrl.u32 %v1100, 7
    %v1102 = vsub.s32 0, %v1101
    %v1103 = vrot.slane %v1098, %v1102
    %1105 = vmatprep.subr.mxu0 0.0
    %1106 = vmatpush1.msra.mxu0 %v1081
    %1107 = vmatprep.subr.mxu0 0.0
    %1108 = vmatpush1.msra.mxu0 %v1082
    %1109 = vmatprep.subr.mxu0 0.0
    %1110 = vmatpush1.msra.mxu0 %v1083
    %1111 = vmatprep.subr.mxu0 0.0
    %1112 = vmatpush1.msra.mxu0 %v1084
    %1113 = vmatprep.subr.mxu0 0.0
    %1114 = vmatpush1.msra.mxu0 %v1085
    %1115 = vmatprep.subr.mxu0 0.0
    %1116 = vmatpush1.msra.mxu0 %v1086
    %1117 = vmatprep.subr.mxu0 0.0
    %1118 = vmatpush1.msra.mxu0 %v1087
    %1119 = vmatprep.subr.mxu0 0.0
    %1120 = vmatpush1.msra.mxu0 %v1088
    %1121 = vmatprep.subr.mxu0 0.0
    %1122 = vmatpush1.msra.mxu0 %v1089
    %1123 = vmatprep.subr.mxu0 0.0
    %1124 = vmatpush1.msra.mxu0 %v1090
    %1125 = vmatprep.subr.mxu0 0.0
    %1126 = vmatpush1.msra.mxu0 %v1091
    %1127 = vmatprep.subr.mxu0 0.0
    %1128 = vmatpush1.msra.mxu0 %v1092
    %1129 = vmatprep.subr.mxu0 0.0
    %1130 = vmatpush1.msra.mxu0 %v1093
    %1131 = vmatprep.subr.mxu0 0.0
    %1132 = vmatpush1.msra.mxu0 %v1094
    %1133 = vmatprep.subr.mxu0 0.0
    %1134 = vmatpush1.msra.mxu0 %v1095
    %1135 = vmatprep.subr.mxu0 0.0
    %1136 = vmatpush1.msra.mxu0 %v1096
    %1137 = vmatprep.subr.mxu0 0.0
    %1138 = vmatpush1.msra.mxu0 0.0
    %1139 = vmatprep.subr.mxu0 0.0
    %1140 = vmatpush1.msra.mxu0 0.0
    %1141 = vmatprep.subr.mxu0 0.0
    %1142 = vmatpush1.msra.mxu0 0.0
    %1143 = vmatprep.subr.mxu0 0.0
    %1144 = vmatpush1.msra.mxu0 0.0
    %1145 = vmatprep.subr.mxu0 0.0
    %1146 = vmatpush1.msra.mxu0 0.0
    %1147 = vmatprep.subr.mxu0 0.0
    %1148 = vmatpush1.msra.mxu0 0.0
    %1149 = vmatprep.subr.mxu0 0.0
    %1150 = vmatpush1.msra.mxu0 0.0
    %1151 = vmatprep.subr.mxu0 0.0
    %1152 = vmatpush1.msra.mxu0 0.0
    %1153 = vmatprep.subr.mxu0 0.0
    %1154 = vmatpush1.msra.mxu0 0.0
    %1155 = vmatprep.subr.mxu0 0.0
    %1156 = vmatpush1.msra.mxu0 0.0
    %1157 = vmatprep.subr.mxu0 0.0
    %1158 = vmatpush1.msra.mxu0 0.0
    %1159 = vmatprep.subr.mxu0 0.0
    %1160 = vmatpush1.msra.mxu0 0.0
    %1161 = vmatprep.subr.mxu0 0.0
    %1162 = vmatpush1.msra.mxu0 0.0
    %1163 = vmatprep.subr.mxu0 0.0
    %1164 = vmatpush1.msra.mxu0 0.0
    %1165 = vmatprep.subr.mxu0 0.0
    %1166 = vmatpush1.msra.mxu0 0.0
    %1167 = vmatprep.subr.mxu0 0.0
    %1168 = vmatpush1.msra.mxu0 0.0
    %1169 = vmatprep.mubr.f32.mxu0 0.0
    %1170 = vmatmul.mubr.f32.gmra.mrb[0].mxu0 %v1076
    %v1171 = vpop.f32.mrb[0].mxu0
    %v1172 = vadd.f32 %v1103, %v1171
    %v1173 = vpop.f32.mrb[0].mxu0
    %1174 = vmatprep.mubr.f32.mxu0 0.0
    %1175 = vmatmul.mubr.f32.gmra.mrb[0].mxu0 %v1077
    %v1176 = vpop.f32.mrb[0].mxu0
    %v1177 = vadd.f32 %v1103, %v1176
    %v1178 = vpop.f32.mrb[0].mxu0
    %1179 = vmatprep.mubr.f32.mxu0 0.0
    %1180 = vmatmul.mubr.f32.gmra.mrb[0].mxu0 %v1078
    %v1181 = vpop.f32.mrb[0].mxu0
    %v1182 = vadd.f32 %v1103, %v1181
    %v1183 = vpop.f32.mrb[0].mxu0
    %1184 = vmatprep.mubr.f32.mxu0 0.0
    %1185 = vmatmul.mubr.f32.gmra.mrb[0].mxu0 %v1079
    %v1186 = vpop.f32.mrb[0].mxu0
    %v1187 = vadd.f32 %v1103, %v1186
    %v1188 = vpop.f32.mrb[0].mxu0
    %1189 = vdwg.mxu0
    %v1190 = vpack.c.bf16 %v1177, %v1172
    %v1191 = vpack.c.bf16 %v1187, %v1182
    %1192 = vmatprep.subr.bf16.mxu0 0
    %1193 = vmatpush1.bf16.msra.mxu0 %v1190
    %1194 = vmatprep.subr.bf16.mxu0 0
    %1195 = vmatpush1.bf16.msra.mxu0 %v1191
    %1196 = vmatprep.subr.bf16.mxu0 0
    %1197 = vmatpush1.bf16.msra.mxu0 0
    %1198 = vmatprep.subr.bf16.mxu0 0
    %1199 = vmatpush1.bf16.msra.mxu0 0
    %1200 = vmatprep.subr.bf16.mxu0 0
    %1201 = vmatpush1.bf16.msra.mxu0 0
    %1202 = vmatprep.subr.bf16.mxu0 0
    %1203 = vmatpush1.bf16.msra.mxu0 0
    %1204 = vmatprep.subr.bf16.mxu0 0
    %1205 = vmatpush1.bf16.msra.mxu0 0
    %1206 = vmatprep.subr.bf16.mxu0 0
    %1207 = vmatpush1.bf16.msra.mxu0 0
    %1208 = vmatprep.subr.bf16.mxu0 0
    %1209 = vmatpush1.bf16.msra.mxu0 0
    %1210 = vmatprep.subr.bf16.mxu0 0
    %1211 = vmatpush1.bf16.msra.mxu0 0
    %1212 = vmatprep.subr.bf16.mxu0 0
    %1213 = vmatpush1.bf16.msra.mxu0 0
    %1214 = vmatprep.subr.bf16.mxu0 0
    %1215 = vmatpush1.bf16.msra.mxu0 0
    %1216 = vmatprep.subr.bf16.mxu0 0
    %1217 = vmatpush1.bf16.msra.mxu0 0
    %1218 = vmatprep.subr.bf16.mxu0 0
    %1219 = vmatpush1.bf16.msra.mxu0 0
    %1220 = vmatprep.subr.bf16.mxu0 0
    %1221 = vmatpush1.bf16.msra.mxu0 0
    %1222 = vmatprep.subr.bf16.mxu0 0
    %1223 = vmatpush1.bf16.msra.mxu0 0
    %1224 = vmatprep.mubr.bf16.mxu0 0
    %1225 = vmatmul.mubr.bf16.gmra.mrb[0].mxu0 %v524
    %v1226 = vpop.f32.mrb[0].mxu0
    %v1227 = vadd.f32 0.0, %v1226
    %v1228 = vpop.f32.mrb[0].mxu0
    %v1229 = vpop.f32.mrb[0].mxu0
    %v1230 = vadd.f32 0.0, %v1229
    %v1231 = vpop.f32.mrb[0].mxu0
    %1232 = vdwg.mxu0
    %vm1233 = vcmp.gt.f32.partialorder %v1227, 0.0
    %vm1234 = vcmp.gt.f32.partialorder %v1230, 0.0
    %v1235 = vmul.f32 %v1227, 0.01
    %v1236 = vmul.f32 %v1230, 0.01
    %v1237 = vsel %vm1233, %v1227, %v1235
    %v1238 = vsel %vm1234, %v1230, %v1236
    %v1239 = vld [vmem:[%s11] sm:$0xff]
    %v1240 = vld [vmem:[%s11 + $0x8] sm:$0xff]
    %v1241 = vld [vmem:[%s11 + $0x10] sm:$0xff]
    %v1242 = vld [vmem:[%s11 + $0x18] sm:$0xff]
    %v1243 = vld [vmem:[%s11 + $0x20] sm:$0xff]
    %v1244 = vld [vmem:[%s11 + $0x28] sm:$0xff]
    %v1245 = vld [vmem:[%s11 + $0x30] sm:$0xff]
    %v1246 = vld [vmem:[%s11 + $0x38] sm:$0xff]
    %v1247 = vld [vmem:[%s11 + $0x40] sm:$0xff]
    %v1248 = vld [vmem:[%s11 + $0x48] sm:$0xff]
    %v1249 = vld [vmem:[%s11 + $0x50] sm:$0xff]
    %v1250 = vld [vmem:[%s11 + $0x58] sm:$0xff]
    %v1251 = vld [vmem:[%s11 + $0x60] sm:$0xff]
    %v1252 = vld [vmem:[%s11 + $0x68] sm:$0xff]
    %v1253 = vld [vmem:[%s11 + $0x70] sm:$0xff]
    %v1254 = vld [vmem:[%s11 + $0x78] sm:$0xff]
    %v1255 = vld [vmem:[%s12] sm:$0x1]
    %v1257 = vlaneseq
    %v1258 = vshrl.u32 %v1257, 7
    %v1259 = vsub.s32 0, %v1258
    %v1260 = vrot.slane %v1255, %v1259
    %1262 = vmatprep.subr.mxu0 0.0
    %1263 = vmatpush1.msra.mxu0 %v1239
    %1264 = vmatprep.subr.mxu0 0.0
    %1265 = vmatpush1.msra.mxu0 %v1240
    %1266 = vmatprep.subr.mxu0 0.0
    %1267 = vmatpush1.msra.mxu0 %v1241
    %1268 = vmatprep.subr.mxu0 0.0
    %1269 = vmatpush1.msra.mxu0 %v1242
    %1270 = vmatprep.subr.mxu0 0.0
    %1271 = vmatpush1.msra.mxu0 %v1243
    %1272 = vmatprep.subr.mxu0 0.0
    %1273 = vmatpush1.msra.mxu0 %v1244
    %1274 = vmatprep.subr.mxu0 0.0
    %1275 = vmatpush1.msra.mxu0 %v1245
    %1276 = vmatprep.subr.mxu0 0.0
    %1277 = vmatpush1.msra.mxu0 %v1246
    %1278 = vmatprep.subr.mxu0 0.0
    %1279 = vmatpush1.msra.mxu0 %v1247
    %1280 = vmatprep.subr.mxu0 0.0
    %1281 = vmatpush1.msra.mxu0 %v1248
    %1282 = vmatprep.subr.mxu0 0.0
    %1283 = vmatpush1.msra.mxu0 %v1249
    %1284 = vmatprep.subr.mxu0 0.0
    %1285 = vmatpush1.msra.mxu0 %v1250
    %1286 = vmatprep.subr.mxu0 0.0
    %1287 = vmatpush1.msra.mxu0 %v1251
    %1288 = vmatprep.subr.mxu0 0.0
    %1289 = vmatpush1.msra.mxu0 %v1252
    %1290 = vmatprep.subr.mxu0 0.0
    %1291 = vmatpush1.msra.mxu0 %v1253
    %1292 = vmatprep.subr.mxu0 0.0
    %1293 = vmatpush1.msra.mxu0 %v1254
    %1294 = vmatprep.subr.mxu0 0.0
    %1295 = vmatpush1.msra.mxu0 0.0
    %1296 = vmatprep.subr.mxu0 0.0
    %1297 = vmatpush1.msra.mxu0 0.0
    %1298 = vmatprep.subr.mxu0 0.0
    %1299 = vmatpush1.msra.mxu0 0.0
    %1300 = vmatprep.subr.mxu0 0.0
    %1301 = vmatpush1.msra.mxu0 0.0
    %1302 = vmatprep.subr.mxu0 0.0
    %1303 = vmatpush1.msra.mxu0 0.0
    %1304 = vmatprep.subr.mxu0 0.0
    %1305 = vmatpush1.msra.mxu0 0.0
    %1306 = vmatprep.subr.mxu0 0.0
    %1307 = vmatpush1.msra.mxu0 0.0
    %1308 = vmatprep.subr.mxu0 0.0
    %1309 = vmatpush1.msra.mxu0 0.0
    %1310 = vmatprep.subr.mxu0 0.0
    %1311 = vmatpush1.msra.mxu0 0.0
    %1312 = vmatprep.subr.mxu0 0.0
    %1313 = vmatpush1.msra.mxu0 0.0
    %1314 = vmatprep.subr.mxu0 0.0
    %1315 = vmatpush1.msra.mxu0 0.0
    %1316 = vmatprep.subr.mxu0 0.0
    %1317 = vmatpush1.msra.mxu0 0.0
    %1318 = vmatprep.subr.mxu0 0.0
    %1319 = vmatpush1.msra.mxu0 0.0
    %1320 = vmatprep.subr.mxu0 0.0
    %1321 = vmatpush1.msra.mxu0 0.0
    %1322 = vmatprep.subr.mxu0 0.0
    %1323 = vmatpush1.msra.mxu0 0.0
    %1324 = vmatprep.subr.mxu0 0.0
    %1325 = vmatpush1.msra.mxu0 0.0
    %1326 = vmatprep.mubr.f32.mxu0 0.0
    %1327 = vmatmul.mubr.f32.gmra.mrb[0].mxu0 %v1237
    %v1328 = vpop.f32.mrb[0].mxu0
    %v1329 = vadd.f32 %v1260, %v1328
    %v1330 = vpop.f32.mrb[0].mxu0
    %1331 = vmatprep.mubr.f32.mxu0 0.0
    %1332 = vmatmul.mubr.f32.gmra.mrb[0].mxu0 %v1238
    %v1333 = vpop.f32.mrb[0].mxu0
    %v1334 = vadd.f32 %v1260, %v1333
    %v1335 = vpop.f32.mrb[0].mxu0
    %1336 = vdwg.mxu0
    %vm1337 = vcmp.gt.f32.partialorder %v1329, 0.0
    %vm1338 = vcmp.gt.f32.partialorder %v1334, 0.0
    %v1339 = vmul.f32 %v1329, 0.01
    %v1340 = vmul.f32 %v1334, 0.01
    %v1341 = vsel %vm1337, %v1329, %v1339
    %v1342 = vsel %vm1338, %v1334, %v1340
    %v1343 = vld [vmem:[%s13] sm:$0xff]
    %v1344 = vld [vmem:[%s13 + $0x8] sm:$0xff]
    %v1345 = vld [vmem:[%s13 + $0x10] sm:$0xff]
    %v1346 = vld [vmem:[%s13 + $0x18] sm:$0xff]
    %v1347 = vld [vmem:[%s13 + $0x20] sm:$0xff]
    %v1348 = vld [vmem:[%s13 + $0x28] sm:$0xff]
    %v1349 = vld [vmem:[%s13 + $0x30] sm:$0xff]
    %v1350 = vld [vmem:[%s13 + $0x38] sm:$0xff]
    %v1351 = vld [vmem:[%s13 + $0x40] sm:$0xff]
    %v1352 = vld [vmem:[%s13 + $0x48] sm:$0xff]
    %v1353 = vld [vmem:[%s13 + $0x50] sm:$0xff]
    %v1354 = vld [vmem:[%s13 + $0x58] sm:$0xff]
    %v1355 = vld [vmem:[%s13 + $0x60] sm:$0xff]
    %v1356 = vld [vmem:[%s13 + $0x68] sm:$0xff]
    %v1357 = vld [vmem:[%s13 + $0x70] sm:$0xff]
    %v1358 = vld [vmem:[%s13 + $0x78] sm:$0xff]
    %v1359 = vld [vmem:[%s14] sm:$0x1]
    %v1361 = vlaneseq
    %v1362 = vshrl.u32 %v1361, 7
    %v1363 = vsub.s32 0, %v1362
    %v1364 = vrot.slane %v1359, %v1363
    %1366 = vmatprep.subr.mxu0 0.0
    %1367 = vmatpush1.msra.mxu0 %v1343
    %1368 = vmatprep.subr.mxu0 0.0
    %1369 = vmatpush1.msra.mxu0 %v1344
    %1370 = vmatprep.subr.mxu0 0.0
    %1371 = vmatpush1.msra.mxu0 %v1345
    %1372 = vmatprep.subr.mxu0 0.0
    %1373 = vmatpush1.msra.mxu0 %v1346
    %1374 = vmatprep.subr.mxu0 0.0
    %1375 = vmatpush1.msra.mxu0 %v1347
    %1376 = vmatprep.subr.mxu0 0.0
    %1377 = vmatpush1.msra.mxu0 %v1348
    %1378 = vmatprep.subr.mxu0 0.0
    %1379 = vmatpush1.msra.mxu0 %v1349
    %1380 = vmatprep.subr.mxu0 0.0
    %1381 = vmatpush1.msra.mxu0 %v1350
    %1382 = vmatprep.subr.mxu0 0.0
    %1383 = vmatpush1.msra.mxu0 %v1351
    %1384 = vmatprep.subr.mxu0 0.0
    %1385 = vmatpush1.msra.mxu0 %v1352
    %1386 = vmatprep.subr.mxu0 0.0
    %1387 = vmatpush1.msra.mxu0 %v1353
    %1388 = vmatprep.subr.mxu0 0.0
    %1389 = vmatpush1.msra.mxu0 %v1354
    %1390 = vmatprep.subr.mxu0 0.0
    %1391 = vmatpush1.msra.mxu0 %v1355
    %1392 = vmatprep.subr.mxu0 0.0
    %1393 = vmatpush1.msra.mxu0 %v1356
    %1394 = vmatprep.subr.mxu0 0.0
    %1395 = vmatpush1.msra.mxu0 %v1357
    %1396 = vmatprep.subr.mxu0 0.0
    %1397 = vmatpush1.msra.mxu0 %v1358
    %1398 = vmatprep.subr.mxu0 0.0
    %1399 = vmatpush1.msra.mxu0 0.0
    %1400 = vmatprep.subr.mxu0 0.0
    %1401 = vmatpush1.msra.mxu0 0.0
    %1402 = vmatprep.subr.mxu0 0.0
    %1403 = vmatpush1.msra.mxu0 0.0
    %1404 = vmatprep.subr.mxu0 0.0
    %1405 = vmatpush1.msra.mxu0 0.0
    %1406 = vmatprep.subr.mxu0 0.0
    %1407 = vmatpush1.msra.mxu0 0.0
    %1408 = vmatprep.subr.mxu0 0.0
    %1409 = vmatpush1.msra.mxu0 0.0
    %1410 = vmatprep.subr.mxu0 0.0
    %1411 = vmatpush1.msra.mxu0 0.0
    %1412 = vmatprep.subr.mxu0 0.0
    %1413 = vmatpush1.msra.mxu0 0.0
    %1414 = vmatprep.subr.mxu0 0.0
    %1415 = vmatpush1.msra.mxu0 0.0
    %1416 = vmatprep.subr.mxu0 0.0
    %1417 = vmatpush1.msra.mxu0 0.0
    %1418 = vmatprep.subr.mxu0 0.0
    %1419 = vmatpush1.msra.mxu0 0.0
    %1420 = vmatprep.subr.mxu0 0.0
    %1421 = vmatpush1.msra.mxu0 0.0
    %1422 = vmatprep.subr.mxu0 0.0
    %1423 = vmatpush1.msra.mxu0 0.0
    %1424 = vmatprep.subr.mxu0 0.0
    %1425 = vmatpush1.msra.mxu0 0.0
    %1426 = vmatprep.subr.mxu0 0.0
    %1427 = vmatpush1.msra.mxu0 0.0
    %1428 = vmatprep.subr.mxu0 0.0
    %1429 = vmatpush1.msra.mxu0 0.0
    %1430 = vmatprep.mubr.f32.mxu0 0.0
    %1431 = vmatmul.mubr.f32.gmra.mrb[0].mxu0 %v1341
    %v1432 = vpop.f32.mrb[0].mxu0
    %v1433 = vadd.f32 %v1364, %v1432
    %v1434 = vpop.f32.mrb[0].mxu0
    %1435 = vmatprep.mubr.f32.mxu0 0.0
    %1436 = vmatmul.mubr.f32.gmra.mrb[0].mxu0 %v1342
    %v1437 = vpop.f32.mrb[0].mxu0
    %v1438 = vadd.f32 %v1364, %v1437
    %v1439 = vpop.f32.mrb[0].mxu0
    %1440 = vdwg.mxu0
    %1441 = vst [vmem:[#allocation2] sm:$0xff] %v1433
    %1442 = vst [vmem:[#allocation2 + $0x8] sm:$0xff] %v1438
    // Predicated region
    $region62: #{clique_potential_gnn.1} parent=1 // pred_check
      _
    $region63: #{clique_potential_gnn.1} parent=1 // pred_check_branch
      %1444 = sbr.rel (0) target = $region65
    $region64: #{clique_potential_gnn.1} parent=1 // pred_region
      %s1446 = ssub.s32 256, 256
      %1447 = vsyncadd [#allocation3], %s1446
      %s1448 = sshll.u32 [#allocation2], 4
      %s1449 = int_to_ptr.vmem [resolvable:$true] %s1448
      %1454 = dma.vmem_to_hbm [thread:$0]  %s1449, 256, %s15, [#allocation3], 128, 128, 8
    $region65: #{clique_potential_gnn.1} parent=1 // pred_fallthru
      _
    // Predicated region
    $region66: #{clique_potential_gnn.1} parent=1 // pred_check
      _
    $region67: #{clique_potential_gnn.1} parent=1 // pred_check_branch
      %1456 = sbr.rel (0) target = $region69
    $region68: #{clique_potential_gnn.1} parent=1 // pred_region
      %1457 = dma.done [#allocation3], 256
    $region69: #{clique_potential_gnn.1} parent=1 // pred_fallthru
      _
    %1458 = vsyncpa [#allocation3], 1

</llo_original>
